<compile_context>
chip_gen: v7x
topology: tpu7x:2x2x1
jax: 0.10.0
libtpu: 0.0.40
codegen_flags: <defaults>
</compile_context>

<pallas_src>
import math

import jax
import jax.numpy as jnp
from jax import lax
from jax.experimental import pallas as pl
from jax.experimental.pallas import tpu as pltpu

CP = 128  # lane-dense padded channel width


def _pad2(a, rows, cols):
    a = jnp.asarray(a, jnp.float32)
    return jnp.pad(a, ((0, rows - a.shape[0]), (0, cols - a.shape[1])))


def build_adjacency(edge_src, edge_dst, n_src, n_dst):
    """Count adjacency (bf16, MXU operand) + exact f32 1/deg column scale."""
    a = jnp.zeros((n_dst, n_src), jnp.float32).at[edge_dst, edge_src].add(1.0)
    deg = jnp.sum(a, axis=1, keepdims=True)
    inv_deg = jnp.where(deg > 0.0, 1.0 / jnp.maximum(deg, 1.0), 0.0)
    return a.astype(jnp.bfloat16), inv_deg.astype(jnp.float32)


def build_fused_forward(node_types, edge_types, time_types, num_layers,
                        channels, out_channels, batch_size, entity_table):
    """Builds the single fused Pallas forward + a parameter packer."""

    # ---- static slot maps for the stacked weight tensors ----
    mat_names = [f"enc_w_{nt}" for nt in node_types] + ["temp_w", "head_w"]
    conv_names = [f"cw_{l}_{src}_{dst}"
                  for l in range(num_layers) for (src, dst) in edge_types]
    vec_names = [f"enc_b_{nt}" for nt in node_types] + ["temp_b"]
    for l in range(num_layers):
        for (src, dst) in edge_types:
            vec_names.append(f"cb_{l}_{src}_{dst}")
        for nt in node_types:
            vec_names += [f"ln_g_{l}_{nt}", f"ln_b_{l}_{nt}"]
    vec_names += ["head_b", "pe_div", "pe_phase", "chan_mask"]
    MAT = {n: i for i, n in enumerate(mat_names)}
    CMAT = {n: i for i, n in enumerate(conv_names)}
    VEC = {n: i for i, n in enumerate(vec_names)}

    def kernel(*refs):
        it = iter(refs)
        feat = {nt: next(it) for nt in node_types}       # bf16 [N, CP]
        rtime = {nt: next(it) for nt in time_types}      # f32  [N, 1]
        adj = {et: next(it) for et in edge_types}        # bf16 [n_dst, n_src]
        invd = {et: next(it) for et in edge_types}       # f32  [n_dst, 1]
        mats_ref = next(it)                              # bf16 [NM, CP, CP]
        conv_ref = next(it)                              # bf16 [NC, 2CP, CP]
        vecs_ref = next(it)                              # f32  [NV, CP]
        out_ref = next(it)                               # f32  [B, CP]

        def mat(name):                                   # [CP, CP] bf16
            return mats_ref[MAT[name]]

        def cmat(name):                                  # [2CP, CP] bf16
            return conv_ref[CMAT[name]]

        def vec(name):                                   # [1, CP] f32
            return vecs_ref[pl.ds(VEC[name], 1), :]

        def mxu(a_bf16, b_bf16):                         # MXU, f32 accumulate
            return jnp.dot(a_bf16, b_bf16, preferred_element_type=jnp.float32)

        # 1. HeteroEncoder: per-node-type Linear (padded lanes stay zero).
        # TODO(synk): real HeteroEncoder runs per-stype torch_frame encoders on
        #             a TensorFrame; here each node type's numeric features go
        #             through a single Linear.
        x = {nt: mxu(feat[nt][...], mat(f"enc_w_{nt}")) + vec(f"enc_b_{nt}")
             for nt in node_types}

        # 2. HeteroTemporalEncoder: single-sin positional encoding
        #    sin(t*div + phase)  (phase = 0 / pi/2 per lane => sin / cos),
        #    then Linear + residual add. div/phase are host-precomputed.
        div = vec("pe_div")
        phase = vec("pe_phase")
        for nt in time_types:
            pe = jnp.sin(rtime[nt][...] * div + phase)               # f32
            x[nt] = (x[nt] + mxu(pe.astype(jnp.bfloat16), mat("temp_w"))
                     + vec("temp_b"))

        # 3. HeteroGraphSAGE: per-edge-type SAGEConv.  Mean aggregation is a
        #    bf16 count-adjacency matmul followed by an exact f32 1/deg scale.
        #    The dual linear (lin_l(agg) + lin_r(x_dst)) is ONE K=256 matmul
        #    on [agg | x_dst] with the pre-stacked [wl; wr] weight.  Fused
        #    LayerNorm (two-pass, masked) + ReLU; no intermediate HBM traffic.
        chan_mask = vec("chan_mask")
        inv_c = 1.0 / channels
        for l in range(num_layers):
            xb = {nt: x[nt].astype(jnp.bfloat16) for nt in node_types}
            new_x = {}
            for nt in node_types:
                acc = None
                for (src, dst) in edge_types:
                    if dst != nt:
                        continue
                    agg = mxu(adj[(src, dst)][...], xb[src]) \
                        * invd[(src, dst)][...]
                    hin = jnp.concatenate(
                        [agg.astype(jnp.bfloat16), xb[dst]], axis=-1)
                    h = (mxu(hin, cmat(f"cw_{l}_{src}_{dst}"))
                         + vec(f"cb_{l}_{src}_{dst}"))
                    acc = h if acc is None else acc + h
                if acc is None:
                    acc = x[nt]   # node type with no incoming edge types
                # Two-pass LayerNorm over the real channels (padded lanes of
                # acc are exactly zero; chan_mask zeroes their contribution to
                # the variance).  Gamma/beta padding is zero -> output pad 0.
                mu = jnp.sum(acc, axis=-1, keepdims=True) * inv_c
                d = (acc - mu) * chan_mask
                var = jnp.sum(d * d, axis=-1, keepdims=True) * inv_c
                y = (d * lax.rsqrt(var + 1e-5)
                     * vec(f"ln_g_{l}_{nt}") + vec(f"ln_b_{l}_{nt}"))
                new_x[nt] = jnp.maximum(y, 0.0)
            x = new_x

        # 4. MLP head (num_layers=1 -> single Linear) on the seed rows.
        # NOTE: assumes the seed/entity nodes are the first `batch_size` rows
        #       of the entity table (standard relbench batch layout).
        seed = x[entity_table][:batch_size, :].astype(jnp.bfloat16)
        out_ref[...] = mxu(seed, mat("head_w")) + vec("head_b")

    def pack_params(params):
        mats, convs, vecs = {}, {}, {}
        for nt in node_types:
            mats[f"enc_w_{nt}"] = params["enc_w"][nt]
            vecs[f"enc_b_{nt}"] = params["enc_b"][nt]
        mats["temp_w"] = params["temp_w"]
        vecs["temp_b"] = params["temp_b"]
        for l, layer in enumerate(params["gnn"]):
            for (src, dst), p in layer["convs"].items():
                # stack [wl; wr] along K -> one [256,128] MXU weight
                convs[f"cw_{l}_{src}_{dst}"] = jnp.concatenate(
                    [_pad2(p["wl"], CP, CP), _pad2(p["wr"], CP, CP)], axis=0)
                vecs[f"cb_{l}_{src}_{dst}"] = p["b"]
            for nt, p in layer["ln"].items():
                vecs[f"ln_g_{l}_{nt}"] = p["g"]
                vecs[f"ln_b_{l}_{nt}"] = p["b"]
        mats["head_w"] = params["head_w"]
        vecs["head_b"] = params["head_b"]

        # hoisted constants: PE div / phase and the LayerNorm channel mask
        lane = jnp.arange(CP, dtype=jnp.float32)
        vecs["pe_div"] = jnp.exp(
            -jnp.floor(lane * 0.5)
            * (2.0 * math.log(10000.0) / channels))[None, :]
        vecs["pe_phase"] = jnp.where(
            (jnp.arange(CP) % 2) == 0, 0.0, 0.5 * math.pi)[None, :]
        vecs["chan_mask"] = (
            jnp.arange(CP) < channels).astype(jnp.float32)[None, :]

        mstack = jnp.stack(
            [_pad2(mats[n], CP, CP) for n in mat_names]).astype(jnp.bfloat16)
        cstack = jnp.stack(
            [convs[n] for n in conv_names]).astype(jnp.bfloat16)
        vstack = jnp.concatenate(
            [_pad2(vecs[n], 1, CP) for n in vec_names],
            axis=0).astype(jnp.float32)                     # dense [NV, CP]
        return mstack, cstack, vstack

    @jax.jit
    def forward(feats, rel_times, adjs, inv_degs, mats, conv_mats, vecs):
        inputs = ([feats[nt] for nt in node_types]
                  + [rel_times[nt] for nt in time_types]
                  + [adjs[et] for et in edge_types]
                  + [inv_degs[et] for et in edge_types]
                  + [mats, conv_mats, vecs])
        vmem = pl.BlockSpec(memory_space=pltpu.MemorySpace.VMEM)
        out = pl.pallas_call(
            kernel,
            out_shape=jax.ShapeDtypeStruct((batch_size, CP), jnp.float32),
            in_specs=[vmem] * len(inputs),
            out_specs=vmem,
            compiler_params=pltpu.CompilerParams(
                vmem_limit_bytes=32 * 1024 * 1024),
        )(*inputs)
        return out[:, :out_channels]

    return forward, pack_params


# ----------------------------------------------------------------------------
# main
# ----------------------------------------------------------------------------
if __name__ == "__main__":
    key = jax.random.PRNGKey(0)

    C = 32               # args.channels
    OUT = 1              # out_channels
    NUM_LAYERS = 2       # GNN depth
    B = 8                # seed_time.size(0)
    node_types = ("entity", "other")
    n_nodes = {"entity": 16, "other": 24}
    n_feat = {"entity": 12, "other": 8}
    edge_types = (("entity", "other"), ("other", "entity"))
    time_types = ("entity",)
    n_edges = 40
    entity_table = "entity"

    keys = iter(jax.random.split(key, 64))

    def w_init(shape, scale=0.1):
        return (scale * jax.random.normal(next(keys), shape)).astype(jnp.float32)

    # ---- parameters (deterministic, unpadded "torch-like" shapes) ----
    params = {
        "enc_w": {nt: w_init((n_feat[nt], C)) for nt in node_types},
        "enc_b": {nt: w_init((1, C)) for nt in node_types},
        "temp_w": w_init((C, C)),
        "temp_b": w_init((1, C)),
        "gnn": [
            {
                "convs": {
                    et: {"wl": w_init((C, C)), "wr": w_init((C, C)),
                         "b": w_init((1, C))}
                    for et in edge_types
                },
                "ln": {
                    nt: {"g": jnp.ones((1, C), jnp.float32),
                         "b": jnp.zeros((1, C), jnp.float32)}
                    for nt in node_types
                },
            }
            for _ in range(NUM_LAYERS)
        ],
        "head_w": w_init((C, OUT)),
        "head_b": w_init((1, OUT)),
    }

    # ---- synthetic inputs (deterministic) ----
    feat = {nt: jax.random.normal(next(keys),
                                  (n_nodes[nt], n_feat[nt])).astype(jnp.float32)
            for nt in node_types}
    seed_time = (1.7e9 + 86400.0 * jnp.arange(B, dtype=jnp.float32))
    time_ent = 1.7e9 - 86400.0 * jax.random.uniform(
        next(keys), (n_nodes["entity"],), minval=0.0, maxval=30.0)
    batch_ent = jax.random.randint(next(keys), (n_nodes["entity"],), 0, B)

    adjs, inv_degs = {}, {}
    for (src, dst) in edge_types:
        e_src = jax.random.randint(next(keys), (n_edges,), 0, n_nodes[src])
        e_dst = jax.random.randint(next(keys), (n_edges,), 0, n_nodes[dst])
        adjs[(src, dst)], inv_degs[(src, dst)] = build_adjacency(
            e_src, e_dst, n_nodes[src], n_nodes[dst])

    # lane-pad features to 128 and pre-cast to bf16 (MXU operand); per-node
    # rel_time (days) computed on host (tiny gather), sin PE + Linear +
    # residual done inside the kernel.
    feats = {nt: _pad2(feat[nt], n_nodes[nt], CP).astype(jnp.bfloat16)
             for nt in node_types}
    rel_times = {
        "entity": ((seed_time[batch_ent] - time_ent)
                   / (60.0 * 60.0 * 24.0)).astype(jnp.float32)[:, None]
    }

    forward, pack_params = build_fused_forward(
        node_types, edge_types, time_types, NUM_LAYERS, C, OUT, B, entity_table)
    mats, conv_mats, vecs = pack_params(params)

    out = jax.block_until_ready(
        forward(feats, rel_times, adjs, inv_degs, mats, conv_mats, vecs))
    assert out.shape == (B, OUT) and out.dtype == jnp.float32
    print("KERNEL_OK")
</pallas_src>

<mosaic_0001>
module attributes {stable_mosaic.version = 11 : i64} {
  func.func @kernel(%arg0: memref<16x128xbf16, #tpu.memory_space<vmem>>, %arg1: memref<24x128xbf16, #tpu.memory_space<vmem>>, %arg2: memref<16x1xf32, #tpu.memory_space<vmem>>, %arg3: memref<24x16xbf16, #tpu.memory_space<vmem>>, %arg4: memref<16x24xbf16, #tpu.memory_space<vmem>>, %arg5: memref<24x1xf32, #tpu.memory_space<vmem>>, %arg6: memref<16x1xf32, #tpu.memory_space<vmem>>, %arg7: memref<4x128x128xbf16, #tpu.memory_space<vmem>>, %arg8: memref<4x256x128xbf16, #tpu.memory_space<vmem>>, %arg9: memref<19x128xf32, #tpu.memory_space<vmem>>, %arg10: memref<8x128xf32, #tpu.memory_space<vmem>>) attributes {dimension_semantics = [], scalar_prefetch = 0 : i64, scratch_operands = 0 : i64, tpu.core_type = #tpu.core_type<tc>} {
    %c0 = arith.constant 0 : index
    %c0_0 = arith.constant 0 : index
    %0 = vector.load %arg0[%c0, %c0_0] : memref<16x128xbf16, #tpu.memory_space<vmem>>, vector<16x128xbf16>
    %c0_1 = arith.constant 0 : index
    %c0_2 = arith.constant 0 : index
    %c0_3 = arith.constant 0 : index
    %1 = vector.load %arg7[%c0_1, %c0_2, %c0_3] : memref<4x128x128xbf16, #tpu.memory_space<vmem>>, vector<1x128x128xbf16>
    %2 = vector.shape_cast %1 : vector<1x128x128xbf16> to vector<128x128xbf16>
    %cst = arith.constant dense<0.000000e+00> : vector<16x128xf32>
    %3 = tpu.matmul %0, %2, %cst {dimension_numbers = #tpu.dot_dimension_numbers<[1], [0], [0], [1], [0, 0, 1, 1], [], []>} : vector<16x128xbf16>, vector<128x128xbf16>, vector<16x128xf32> -> vector<16x128xf32>
    %c0_4 = arith.constant 0 : index
    %c0_5 = arith.constant 0 : index
    %4 = vector.load %arg9[%c0_4, %c0_5] : memref<19x128xf32, #tpu.memory_space<vmem>>, vector<1x128xf32>
    %5 = vector.broadcast %4 : vector<1x128xf32> to vector<16x128xf32>
    %6 = arith.addf %3, %5 : vector<16x128xf32>
    %c0_6 = arith.constant 0 : index
    %c0_7 = arith.constant 0 : index
    %7 = vector.load %arg1[%c0_6, %c0_7] : memref<24x128xbf16, #tpu.memory_space<vmem>>, vector<24x128xbf16>
    %c1 = arith.constant 1 : index
    %c0_8 = arith.constant 0 : index
    %c0_9 = arith.constant 0 : index
    %8 = vector.load %arg7[%c1, %c0_8, %c0_9] : memref<4x128x128xbf16, #tpu.memory_space<vmem>>, vector<1x128x128xbf16>
    %9 = vector.shape_cast %8 : vector<1x128x128xbf16> to vector<128x128xbf16>
    %cst_10 = arith.constant dense<0.000000e+00> : vector<24x128xf32>
    %10 = tpu.matmul %7, %9, %cst_10 {dimension_numbers = #tpu.dot_dimension_numbers<[1], [0], [0], [1], [0, 0, 1, 1], [], []>} : vector<24x128xbf16>, vector<128x128xbf16>, vector<24x128xf32> -> vector<24x128xf32>
    %c1_11 = arith.constant 1 : index
    %c0_12 = arith.constant 0 : index
    %11 = vector.load %arg9[%c1_11, %c0_12] : memref<19x128xf32, #tpu.memory_space<vmem>>, vector<1x128xf32>
    %12 = vector.broadcast %11 : vector<1x128xf32> to vector<24x128xf32>
    %13 = arith.addf %10, %12 : vector<24x128xf32>
    %c16 = arith.constant 16 : index
    %c0_13 = arith.constant 0 : index
    %14 = vector.load %arg9[%c16, %c0_13] : memref<19x128xf32, #tpu.memory_space<vmem>>, vector<1x128xf32>
    %c17 = arith.constant 17 : index
    %c0_14 = arith.constant 0 : index
    %15 = vector.load %arg9[%c17, %c0_14] : memref<19x128xf32, #tpu.memory_space<vmem>>, vector<1x128xf32>
    %c0_15 = arith.constant 0 : index
    %c0_16 = arith.constant 0 : index
    %16 = vector.load %arg2[%c0_15, %c0_16] : memref<16x1xf32, #tpu.memory_space<vmem>>, vector<16x1xf32>
    %17 = vector.broadcast %16 : vector<16x1xf32> to vector<16x128xf32>
    %18 = vector.broadcast %14 : vector<1x128xf32> to vector<16x128xf32>
    %19 = arith.mulf %17, %18 : vector<16x128xf32>
    %20 = vector.broadcast %15 : vector<1x128xf32> to vector<16x128xf32>
    %21 = arith.addf %19, %20 : vector<16x128xf32>
    %22 = math.sin %21 : vector<16x128xf32>
    %23 = arith.truncf %22 : vector<16x128xf32> to vector<16x128xbf16>
    %c2 = arith.constant 2 : index
    %c0_17 = arith.constant 0 : index
    %c0_18 = arith.constant 0 : index
    %24 = vector.load %arg7[%c2, %c0_17, %c0_18] : memref<4x128x128xbf16, #tpu.memory_space<vmem>>, vector<1x128x128xbf16>
    %25 = vector.shape_cast %24 : vector<1x128x128xbf16> to vector<128x128xbf16>
    %cst_19 = arith.constant dense<0.000000e+00> : vector<16x128xf32>
    %26 = tpu.matmul %23, %25, %cst_19 {dimension_numbers = #tpu.dot_dimension_numbers<[1], [0], [0], [1], [0, 0, 1, 1], [], []>} : vector<16x128xbf16>, vector<128x128xbf16>, vector<16x128xf32> -> vector<16x128xf32>
    %27 = arith.addf %6, %26 : vector<16x128xf32>
    %c2_20 = arith.constant 2 : index
    %c0_21 = arith.constant 0 : index
    %28 = vector.load %arg9[%c2_20, %c0_21] : memref<19x128xf32, #tpu.memory_space<vmem>>, vector<1x128xf32>
    %29 = vector.broadcast %28 : vector<1x128xf32> to vector<16x128xf32>
    %30 = arith.addf %27, %29 : vector<16x128xf32>
    %c18 = arith.constant 18 : index
    %c0_22 = arith.constant 0 : index
    %31 = vector.load %arg9[%c18, %c0_22] : memref<19x128xf32, #tpu.memory_space<vmem>>, vector<1x128xf32>
    %32 = arith.truncf %30 : vector<16x128xf32> to vector<16x128xbf16>
    %33 = arith.truncf %13 : vector<24x128xf32> to vector<24x128xbf16>
    %c0_23 = arith.constant 0 : index
    %c0_24 = arith.constant 0 : index
    %34 = vector.load %arg4[%c0_23, %c0_24] : memref<16x24xbf16, #tpu.memory_space<vmem>>, vector<16x24xbf16>
    %cst_25 = arith.constant dense<0.000000e+00> : vector<16x128xf32>
    %35 = tpu.matmul %34, %33, %cst_25 {dimension_numbers = #tpu.dot_dimension_numbers<[1], [0], [0], [1], [0, 0, 1, 1], [], []>} : vector<16x24xbf16>, vector<24x128xbf16>, vector<16x128xf32> -> vector<16x128xf32>
    %c0_26 = arith.constant 0 : index
    %c0_27 = arith.constant 0 : index
    %36 = vector.load %arg6[%c0_26, %c0_27] : memref<16x1xf32, #tpu.memory_space<vmem>>, vector<16x1xf32>
    %37 = vector.broadcast %36 : vector<16x1xf32> to vector<16x128xf32>
    %38 = arith.mulf %35, %37 : vector<16x128xf32>
    %39 = arith.truncf %38 : vector<16x128xf32> to vector<16x128xbf16>
    %40 = tpu.concatenate %39, %32 in 1 : vector<16x128xbf16>, vector<16x128xbf16> -> vector<16x256xbf16>
    %c1_28 = arith.constant 1 : index
    %c0_29 = arith.constant 0 : index
    %c0_30 = arith.constant 0 : index
    %41 = vector.load %arg8[%c1_28, %c0_29, %c0_30] : memref<4x256x128xbf16, #tpu.memory_space<vmem>>, vector<1x256x128xbf16>
    %42 = vector.shape_cast %41 : vector<1x256x128xbf16> to vector<256x128xbf16>
    %cst_31 = arith.constant dense<0.000000e+00> : vector<16x128xf32>
    %43 = tpu.matmul %40, %42, %cst_31 {dimension_numbers = #tpu.dot_dimension_numbers<[1], [0], [0], [1], [0, 0, 1, 1], [], []>} : vector<16x256xbf16>, vector<256x128xbf16>, vector<16x128xf32> -> vector<16x128xf32>
    %c4 = arith.constant 4 : index
    %c0_32 = arith.constant 0 : index
    %44 = vector.load %arg9[%c4, %c0_32] : memref<19x128xf32, #tpu.memory_space<vmem>>, vector<1x128xf32>
    %45 = vector.broadcast %44 : vector<1x128xf32> to vector<16x128xf32>
    %46 = arith.addf %43, %45 : vector<16x128xf32>
    %cst_33 = arith.constant dense<0.000000e+00> : vector<16xf32>
    %47 = vector.multi_reduction <add>, %46, %cst_33 [1] : vector<16x128xf32> to vector<16xf32>
    %48 = vector.shape_cast %47 : vector<16xf32> to vector<16x1xf32>
    %cst_34 = arith.constant 3.125000e-02 : f32
    %49 = vector.broadcast %cst_34 : f32 to vector<16x1xf32>
    %50 = arith.mulf %48, %49 : vector<16x1xf32>
    %51 = vector.broadcast %50 : vector<16x1xf32> to vector<16x128xf32>
    %52 = arith.subf %46, %51 : vector<16x128xf32>
    %53 = vector.broadcast %31 : vector<1x128xf32> to vector<16x128xf32>
    %54 = arith.mulf %52, %53 : vector<16x128xf32>
    %55 = arith.mulf %54, %54 : vector<16x128xf32>
    %cst_35 = arith.constant dense<0.000000e+00> : vector<16xf32>
    %56 = vector.multi_reduction <add>, %55, %cst_35 [1] : vector<16x128xf32> to vector<16xf32>
    %57 = vector.shape_cast %56 : vector<16xf32> to vector<16x1xf32>
    %cst_36 = arith.constant 3.125000e-02 : f32
    %58 = vector.broadcast %cst_36 : f32 to vector<16x1xf32>
    %59 = arith.mulf %57, %58 : vector<16x1xf32>
    %cst_37 = arith.constant 9.99999974E-6 : f32
    %60 = vector.broadcast %cst_37 : f32 to vector<16x1xf32>
    %61 = arith.addf %59, %60 : vector<16x1xf32>
    %62 = math.rsqrt %61 : vector<16x1xf32>
    %63 = vector.broadcast %62 : vector<16x1xf32> to vector<16x128xf32>
    %64 = arith.mulf %54, %63 : vector<16x128xf32>
    %c5 = arith.constant 5 : index
    %c0_38 = arith.constant 0 : index
    %65 = vector.load %arg9[%c5, %c0_38] : memref<19x128xf32, #tpu.memory_space<vmem>>, vector<1x128xf32>
    %66 = vector.broadcast %65 : vector<1x128xf32> to vector<16x128xf32>
    %67 = arith.mulf %64, %66 : vector<16x128xf32>
    %c6 = arith.constant 6 : index
    %c0_39 = arith.constant 0 : index
    %68 = vector.load %arg9[%c6, %c0_39] : memref<19x128xf32, #tpu.memory_space<vmem>>, vector<1x128xf32>
    %69 = vector.broadcast %68 : vector<1x128xf32> to vector<16x128xf32>
    %70 = arith.addf %67, %69 : vector<16x128xf32>
    %cst_40 = arith.constant 0.000000e+00 : f32
    %71 = vector.broadcast %cst_40 : f32 to vector<16x128xf32>
    %72 = arith.maximumf %70, %71 : vector<16x128xf32>
    %c0_41 = arith.constant 0 : index
    %c0_42 = arith.constant 0 : index
    %73 = vector.load %arg3[%c0_41, %c0_42] : memref<24x16xbf16, #tpu.memory_space<vmem>>, vector<24x16xbf16>
    %cst_43 = arith.constant dense<0.000000e+00> : vector<24x128xf32>
    %74 = tpu.matmul %73, %32, %cst_43 {dimension_numbers = #tpu.dot_dimension_numbers<[1], [0], [0], [1], [0, 0, 1, 1], [], []>} : vector<24x16xbf16>, vector<16x128xbf16>, vector<24x128xf32> -> vector<24x128xf32>
    %c0_44 = arith.constant 0 : index
    %c0_45 = arith.constant 0 : index
    %75 = vector.load %arg5[%c0_44, %c0_45] : memref<24x1xf32, #tpu.memory_space<vmem>>, vector<24x1xf32>
    %76 = vector.broadcast %75 : vector<24x1xf32> to vector<24x128xf32>
    %77 = arith.mulf %74, %76 : vector<24x128xf32>
    %78 = arith.truncf %77 : vector<24x128xf32> to vector<24x128xbf16>
    %79 = tpu.concatenate %78, %33 in 1 : vector<24x128xbf16>, vector<24x128xbf16> -> vector<24x256xbf16>
    %c0_46 = arith.constant 0 : index
    %c0_47 = arith.constant 0 : index
    %c0_48 = arith.constant 0 : index
    %80 = vector.load %arg8[%c0_46, %c0_47, %c0_48] : memref<4x256x128xbf16, #tpu.memory_space<vmem>>, vector<1x256x128xbf16>
    %81 = vector.shape_cast %80 : vector<1x256x128xbf16> to vector<256x128xbf16>
    %cst_49 = arith.constant dense<0.000000e+00> : vector<24x128xf32>
    %82 = tpu.matmul %79, %81, %cst_49 {dimension_numbers = #tpu.dot_dimension_numbers<[1], [0], [0], [1], [0, 0, 1, 1], [], []>} : vector<24x256xbf16>, vector<256x128xbf16>, vector<24x128xf32> -> vector<24x128xf32>
    %c3 = arith.constant 3 : index
    %c0_50 = arith.constant 0 : index
    %83 = vector.load %arg9[%c3, %c0_50] : memref<19x128xf32, #tpu.memory_space<vmem>>, vector<1x128xf32>
    %84 = vector.broadcast %83 : vector<1x128xf32> to vector<24x128xf32>
    %85 = arith.addf %82, %84 : vector<24x128xf32>
    %cst_51 = arith.constant dense<0.000000e+00> : vector<24xf32>
    %86 = vector.multi_reduction <add>, %85, %cst_51 [1] : vector<24x128xf32> to vector<24xf32>
    %87 = vector.shape_cast %86 : vector<24xf32> to vector<24x1xf32>
    %cst_52 = arith.constant 3.125000e-02 : f32
    %88 = vector.broadcast %cst_52 : f32 to vector<24x1xf32>
    %89 = arith.mulf %87, %88 : vector<24x1xf32>
    %90 = vector.broadcast %89 : vector<24x1xf32> to vector<24x128xf32>
    %91 = arith.subf %85, %90 : vector<24x128xf32>
    %92 = vector.broadcast %31 : vector<1x128xf32> to vector<24x128xf32>
    %93 = arith.mulf %91, %92 : vector<24x128xf32>
    %94 = arith.mulf %93, %93 : vector<24x128xf32>
    %cst_53 = arith.constant dense<0.000000e+00> : vector<24xf32>
    %95 = vector.multi_reduction <add>, %94, %cst_53 [1] : vector<24x128xf32> to vector<24xf32>
    %96 = vector.shape_cast %95 : vector<24xf32> to vector<24x1xf32>
    %cst_54 = arith.constant 3.125000e-02 : f32
    %97 = vector.broadcast %cst_54 : f32 to vector<24x1xf32>
    %98 = arith.mulf %96, %97 : vector<24x1xf32>
    %cst_55 = arith.constant 9.99999974E-6 : f32
    %99 = vector.broadcast %cst_55 : f32 to vector<24x1xf32>
    %100 = arith.addf %98, %99 : vector<24x1xf32>
    %101 = math.rsqrt %100 : vector<24x1xf32>
    %102 = vector.broadcast %101 : vector<24x1xf32> to vector<24x128xf32>
    %103 = arith.mulf %93, %102 : vector<24x128xf32>
    %c7 = arith.constant 7 : index
    %c0_56 = arith.constant 0 : index
    %104 = vector.load %arg9[%c7, %c0_56] : memref<19x128xf32, #tpu.memory_space<vmem>>, vector<1x128xf32>
    %105 = vector.broadcast %104 : vector<1x128xf32> to vector<24x128xf32>
    %106 = arith.mulf %103, %105 : vector<24x128xf32>
    %c8 = arith.constant 8 : index
    %c0_57 = arith.constant 0 : index
    %107 = vector.load %arg9[%c8, %c0_57] : memref<19x128xf32, #tpu.memory_space<vmem>>, vector<1x128xf32>
    %108 = vector.broadcast %107 : vector<1x128xf32> to vector<24x128xf32>
    %109 = arith.addf %106, %108 : vector<24x128xf32>
    %cst_58 = arith.constant 0.000000e+00 : f32
    %110 = vector.broadcast %cst_58 : f32 to vector<24x128xf32>
    %111 = arith.maximumf %109, %110 : vector<24x128xf32>
    %112 = arith.truncf %72 : vector<16x128xf32> to vector<16x128xbf16>
    %113 = arith.truncf %111 : vector<24x128xf32> to vector<24x128xbf16>
    %c0_59 = arith.constant 0 : index
    %c0_60 = arith.constant 0 : index
    %114 = vector.load %arg4[%c0_59, %c0_60] : memref<16x24xbf16, #tpu.memory_space<vmem>>, vector<16x24xbf16>
    %cst_61 = arith.constant dense<0.000000e+00> : vector<16x128xf32>
    %115 = tpu.matmul %114, %113, %cst_61 {dimension_numbers = #tpu.dot_dimension_numbers<[1], [0], [0], [1], [0, 0, 1, 1], [], []>} : vector<16x24xbf16>, vector<24x128xbf16>, vector<16x128xf32> -> vector<16x128xf32>
    %c0_62 = arith.constant 0 : index
    %c0_63 = arith.constant 0 : index
    %116 = vector.load %arg6[%c0_62, %c0_63] : memref<16x1xf32, #tpu.memory_space<vmem>>, vector<16x1xf32>
    %117 = vector.broadcast %116 : vector<16x1xf32> to vector<16x128xf32>
    %118 = arith.mulf %115, %117 : vector<16x128xf32>
    %119 = arith.truncf %118 : vector<16x128xf32> to vector<16x128xbf16>
    %120 = tpu.concatenate %119, %112 in 1 : vector<16x128xbf16>, vector<16x128xbf16> -> vector<16x256xbf16>
    %c3_64 = arith.constant 3 : index
    %c0_65 = arith.constant 0 : index
    %c0_66 = arith.constant 0 : index
    %121 = vector.load %arg8[%c3_64, %c0_65, %c0_66] : memref<4x256x128xbf16, #tpu.memory_space<vmem>>, vector<1x256x128xbf16>
    %122 = vector.shape_cast %121 : vector<1x256x128xbf16> to vector<256x128xbf16>
    %cst_67 = arith.constant dense<0.000000e+00> : vector<16x128xf32>
    %123 = tpu.matmul %120, %122, %cst_67 {dimension_numbers = #tpu.dot_dimension_numbers<[1], [0], [0], [1], [0, 0, 1, 1], [], []>} : vector<16x256xbf16>, vector<256x128xbf16>, vector<16x128xf32> -> vector<16x128xf32>
    %c10 = arith.constant 10 : index
    %c0_68 = arith.constant 0 : index
    %124 = vector.load %arg9[%c10, %c0_68] : memref<19x128xf32, #tpu.memory_space<vmem>>, vector<1x128xf32>
    %125 = vector.broadcast %124 : vector<1x128xf32> to vector<16x128xf32>
    %126 = arith.addf %123, %125 : vector<16x128xf32>
    %cst_69 = arith.constant dense<0.000000e+00> : vector<16xf32>
    %127 = vector.multi_reduction <add>, %126, %cst_69 [1] : vector<16x128xf32> to vector<16xf32>
    %128 = vector.shape_cast %127 : vector<16xf32> to vector<16x1xf32>
    %cst_70 = arith.constant 3.125000e-02 : f32
    %129 = vector.broadcast %cst_70 : f32 to vector<16x1xf32>
    %130 = arith.mulf %128, %129 : vector<16x1xf32>
    %131 = vector.broadcast %130 : vector<16x1xf32> to vector<16x128xf32>
    %132 = arith.subf %126, %131 : vector<16x128xf32>
    %133 = vector.broadcast %31 : vector<1x128xf32> to vector<16x128xf32>
    %134 = arith.mulf %132, %133 : vector<16x128xf32>
    %135 = arith.mulf %134, %134 : vector<16x128xf32>
    %cst_71 = arith.constant dense<0.000000e+00> : vector<16xf32>
    %136 = vector.multi_reduction <add>, %135, %cst_71 [1] : vector<16x128xf32> to vector<16xf32>
    %137 = vector.shape_cast %136 : vector<16xf32> to vector<16x1xf32>
    %cst_72 = arith.constant 3.125000e-02 : f32
    %138 = vector.broadcast %cst_72 : f32 to vector<16x1xf32>
    %139 = arith.mulf %137, %138 : vector<16x1xf32>
    %cst_73 = arith.constant 9.99999974E-6 : f32
    %140 = vector.broadcast %cst_73 : f32 to vector<16x1xf32>
    %141 = arith.addf %139, %140 : vector<16x1xf32>
    %142 = math.rsqrt %141 : vector<16x1xf32>
    %143 = vector.broadcast %142 : vector<16x1xf32> to vector<16x128xf32>
    %144 = arith.mulf %134, %143 : vector<16x128xf32>
    %c11 = arith.constant 11 : index
    %c0_74 = arith.constant 0 : index
    %145 = vector.load %arg9[%c11, %c0_74] : memref<19x128xf32, #tpu.memory_space<vmem>>, vector<1x128xf32>
    %146 = vector.broadcast %145 : vector<1x128xf32> to vector<16x128xf32>
    %147 = arith.mulf %144, %146 : vector<16x128xf32>
    %c12 = arith.constant 12 : index
    %c0_75 = arith.constant 0 : index
    %148 = vector.load %arg9[%c12, %c0_75] : memref<19x128xf32, #tpu.memory_space<vmem>>, vector<1x128xf32>
    %149 = vector.broadcast %148 : vector<1x128xf32> to vector<16x128xf32>
    %150 = arith.addf %147, %149 : vector<16x128xf32>
    %cst_76 = arith.constant 0.000000e+00 : f32
    %151 = vector.broadcast %cst_76 : f32 to vector<16x128xf32>
    %152 = arith.maximumf %150, %151 : vector<16x128xf32>
    %153 = vector.extract_strided_slice %152 {offsets = [0, 0], sizes = [8, 128], strides = [1, 1]} : vector<16x128xf32> to vector<8x128xf32>
    %154 = arith.truncf %153 : vector<8x128xf32> to vector<8x128xbf16>
    %c3_77 = arith.constant 3 : index
    %c0_78 = arith.constant 0 : index
    %c0_79 = arith.constant 0 : index
    %155 = vector.load %arg7[%c3_77, %c0_78, %c0_79] : memref<4x128x128xbf16, #tpu.memory_space<vmem>>, vector<1x128x128xbf16>
    %156 = vector.shape_cast %155 : vector<1x128x128xbf16> to vector<128x128xbf16>
    %cst_80 = arith.constant dense<0.000000e+00> : vector<8x128xf32>
    %157 = tpu.matmul %154, %156, %cst_80 {dimension_numbers = #tpu.dot_dimension_numbers<[1], [0], [0], [1], [0, 0, 1, 1], [], []>} : vector<8x128xbf16>, vector<128x128xbf16>, vector<8x128xf32> -> vector<8x128xf32>
    %c15 = arith.constant 15 : index
    %c0_81 = arith.constant 0 : index
    %158 = vector.load %arg9[%c15, %c0_81] : memref<19x128xf32, #tpu.memory_space<vmem>>, vector<1x128xf32>
    %159 = vector.broadcast %158 : vector<1x128xf32> to vector<8x128xf32>
    %160 = arith.addf %157, %159 : vector<8x128xf32>
    %c0_82 = arith.constant 0 : index
    %c0_83 = arith.constant 0 : index
    %161 = vector.load %arg10[%c0_82, %c0_83] : memref<8x128xf32, #tpu.memory_space<vmem>>, vector<8x128xf32>
    tpu.vector_store %arg10[%c0_82, %c0_83], %160 {strides = array<i32>} : memref<8x128xf32, #tpu.memory_space<vmem>>, vector<8x128xf32>,
    return
  }
}

</mosaic_0001>

<llo_original>
// kernel: forward.1
$region0: #{forward.1}
  #allocation0 [shape = 'u32[]', space=smem, size = 0x4, offset = 0x4, fixed_abs, tag = 'smem constant byte address 0x4 - core index']
  #allocation1 [shape = 'u32[144,128]{1,0:T(1,128)}', space=vmem, size = 0x12000, scoped, tag = 'internal scratch']
  %s0 = inlined_call_operand.vmem [shape: bf16[16,128], index: 0, kind: input, shape index: {}]
  %s1 = inlined_call_operand.vmem [shape: bf16[24,128], index: 1, kind: input, shape index: {}]
  %s2 = inlined_call_operand.vmem [shape: f32[16,1], index: 2, kind: input, shape index: {}]
  %s3 = inlined_call_operand.vmem [shape: bf16[24,16], index: 3, kind: input, shape index: {}]
  %s4 = inlined_call_operand.vmem [shape: bf16[16,24], index: 4, kind: input, shape index: {}]
  %s5 = inlined_call_operand.vmem [shape: f32[24,1], index: 5, kind: input, shape index: {}]
  %s6 = inlined_call_operand.vmem [shape: f32[16,1], index: 6, kind: input, shape index: {}]
  %s7 = inlined_call_operand.hbm [shape: bf16[4,128,128], index: 7, kind: input, shape index: {}]
  %s8 = inlined_call_operand.hbm [shape: bf16[4,256,128], index: 8, kind: input, shape index: {}]
  %s9 = inlined_call_operand.vmem [shape: f32[19,128], index: 9, kind: input, shape index: {}]
  %s10 = inlined_call_operand.vmem [shape: f32[8,128], index: 10, kind: output, shape index: {}]
  %s11 = sld [smem:[#allocation0]]
  $region58: #{forward.1} parent=0
    _
  %s13 = ssub.s32 1, %s11
  %s14 = scalar_select 0, %s13, %s11
  $region1: #{forward.1} parent=0
    #allocation2 [shape = 'u8[131072]{0}', space=vmem, size = 0x20000, scoped, tag = 'input window, operand 7, single buffered']
    #allocation3 [shape = 's32[1]{0}', space=sflag, size = 0x4, scoped, tag = 'scoped memory for forward.1']
    #allocation4 [shape = 'u8[262144]{0}', space=vmem, size = 0x40000, scoped, tag = 'input window, operand 8, single buffered']
    #allocation5 [shape = 's32[1]{0}', space=sflag, size = 0x4, scoped, tag = 'scoped memory for forward.1']
    %15 = vsyncpa [#allocation3], 0
    %16 = vsyncpa [#allocation5], 0
    // Predicated region
    $region2: #{forward.1} parent=1 // pred_check
      _
    $region3: #{forward.1} parent=1 // pred_check_branch
      %18 = sbr.rel (0) target = $region5
    $region4: #{forward.1} parent=1 // pred_region
      _
    $region5: #{forward.1} parent=1 // pred_fallthru
      _
    // Predicated region
    $region6: #{forward.1} parent=1 // pred_check
      _
    $region7: #{forward.1} parent=1 // pred_check_branch
      %20 = sbr.rel (0) target = $region9
    $region8: #{forward.1} parent=1 // pred_region
      _
    $region9: #{forward.1} parent=1 // pred_fallthru
      _
    // Predicated region
    $region10: #{forward.1} parent=1 // pred_check
      _
    $region11: #{forward.1} parent=1 // pred_check_branch
      %22 = sbr.rel (0) target = $region13
    $region12: #{forward.1} parent=1 // pred_region
      _
    $region13: #{forward.1} parent=1 // pred_fallthru
      _
    // Predicated region
    $region14: #{forward.1} parent=1 // pred_check
      _
    $region15: #{forward.1} parent=1 // pred_check_branch
      %24 = sbr.rel (0) target = $region17
    $region16: #{forward.1} parent=1 // pred_region
      _
    $region17: #{forward.1} parent=1 // pred_fallthru
      _
    // Predicated region
    $region18: #{forward.1} parent=1 // pred_check
      _
    $region19: #{forward.1} parent=1 // pred_check_branch
      %26 = sbr.rel (0) target = $region21
    $region20: #{forward.1} parent=1 // pred_region
      _
    $region21: #{forward.1} parent=1 // pred_fallthru
      _
    // Predicated region
    $region22: #{forward.1} parent=1 // pred_check
      _
    $region23: #{forward.1} parent=1 // pred_check_branch
      %28 = sbr.rel (0) target = $region25
    $region24: #{forward.1} parent=1 // pred_region
      _
    $region25: #{forward.1} parent=1 // pred_fallthru
      _
    // Predicated region
    $region26: #{forward.1} parent=1 // pred_check
      _
    $region27: #{forward.1} parent=1 // pred_check_branch
      %30 = sbr.rel (0) target = $region29
    $region28: #{forward.1} parent=1 // pred_region
      _
    $region29: #{forward.1} parent=1 // pred_fallthru
      _
    // Predicated region
    $region30: #{forward.1} parent=1 // pred_check
      _
    $region31: #{forward.1} parent=1 // pred_check_branch
      %32 = sbr.rel (0) target = $region33
    $region32: #{forward.1} parent=1 // pred_region
      %s34 = ssub.s32 4096, 4096
      %35 = vsyncadd [#allocation3], %s34
      %s36 = sshll.u32 [#allocation2], 4
      %s37 = int_to_ptr.vmem [resolvable:$true] %s36
      %42 = dma.hbm_to_vmem [thread:$0]  %s7, 4096, %s37, [#allocation3], 64, 64, 4
    $region33: #{forward.1} parent=1 // pred_fallthru
      _
    // Predicated region
    $region34: #{forward.1} parent=1 // pred_check
      _
    $region35: #{forward.1} parent=1 // pred_check_branch
      %44 = sbr.rel (0) target = $region37
    $region36: #{forward.1} parent=1 // pred_region
      %s46 = ssub.s32 8192, 8192
      %47 = vsyncadd [#allocation5], %s46
      %s48 = sshll.u32 [#allocation4], 4
      %s49 = int_to_ptr.vmem [resolvable:$true] %s48
      %54 = dma.hbm_to_vmem [thread:$0]  %s8, 8192, %s49, [#allocation5], 64, 64, 4
    $region37: #{forward.1} parent=1 // pred_fallthru
      _
    // Predicated region
    $region38: #{forward.1} parent=1 // pred_check
      _
    $region39: #{forward.1} parent=1 // pred_check_branch
      %56 = sbr.rel (0) target = $region41
    $region40: #{forward.1} parent=1 // pred_region
      _
    $region41: #{forward.1} parent=1 // pred_fallthru
      _
    // Predicated region
    $region42: #{forward.1} parent=1 // pred_check
      _
    $region43: #{forward.1} parent=1 // pred_check_branch
      %58 = sbr.rel (0) target = $region45
    $region44: #{forward.1} parent=1 // pred_region
      %59 = dma.done [#allocation3], 4096
    $region45: #{forward.1} parent=1 // pred_fallthru
      _
    // Predicated region
    $region46: #{forward.1} parent=1 // pred_check
      _
    $region47: #{forward.1} parent=1 // pred_check_branch
      %61 = sbr.rel (0) target = $region49
    $region48: #{forward.1} parent=1 // pred_region
      %62 = dma.done [#allocation5], 8192
    $region49: #{forward.1} parent=1 // pred_fallthru
      _
    %v64 = vld [vmem:[%s0] sm:$0xf]
    %v65 = vld [vmem:[%s0 + $0x4] sm:$0xf]
    %v66 = vld [vmem:[#allocation2] sm:$0xf]
    %v67 = vld [vmem:[#allocation2 + $0x4] sm:$0xf]
    %v68 = vld [vmem:[#allocation2 + $0x8] sm:$0xf]
    %v69 = vld [vmem:[#allocation2 + $0xc] sm:$0xf]
    %v70 = vld [vmem:[#allocation2 + $0x10] sm:$0xf]
    %v71 = vld [vmem:[#allocation2 + $0x14] sm:$0xf]
    %v72 = vld [vmem:[#allocation2 + $0x18] sm:$0xf]
    %v73 = vld [vmem:[#allocation2 + $0x1c] sm:$0xf]
    %v74 = vld [vmem:[#allocation2 + $0x20] sm:$0xf]
    %v75 = vld [vmem:[#allocation2 + $0x24] sm:$0xf]
    %v76 = vld [vmem:[#allocation2 + $0x28] sm:$0xf]
    %v77 = vld [vmem:[#allocation2 + $0x2c] sm:$0xf]
    %v78 = vld [vmem:[#allocation2 + $0x30] sm:$0xf]
    %v79 = vld [vmem:[#allocation2 + $0x34] sm:$0xf]
    %v80 = vld [vmem:[#allocation2 + $0x38] sm:$0xf]
    %v81 = vld [vmem:[#allocation2 + $0x3c] sm:$0xf]
    %v82 = vld [vmem:[%s9] sm:$0x1]
    %v83 = vlaneseq
    %v84 = vshrl.u32 %v83, 7
    %v85 = vsub.s32 0, %v84
    %v86 = vrot.slane %v82, %v85
    %v89 = vunpack.c.l.b16 %v64
    %v90 = vunpack.c.l.b16 %v65
    %v91 = vpack.c.b16 %v90, %v89
    %v109 = vunpack.c.l.b16 %v66
    %v110 = vunpack.c.l.b16 %v67
    %v111 = vunpack.c.l.b16 %v68
    %v112 = vunpack.c.l.b16 %v69
    %v113 = vunpack.c.l.b16 %v70
    %v114 = vunpack.c.l.b16 %v71
    %v115 = vunpack.c.l.b16 %v72
    %v116 = vunpack.c.l.b16 %v73
    %v117 = vunpack.c.l.b16 %v74
    %v118 = vunpack.c.l.b16 %v75
    %v119 = vunpack.c.l.b16 %v76
    %v120 = vunpack.c.l.b16 %v77
    %v121 = vunpack.c.l.b16 %v78
    %v122 = vunpack.c.l.b16 %v79
    %v123 = vunpack.c.l.b16 %v80
    %v124 = vunpack.c.l.b16 %v81
    %v125 = vpack.c.b16 %v110, %v109
    %v126 = vpack.c.b16 %v112, %v111
    %v127 = vpack.c.b16 %v114, %v113
    %v128 = vpack.c.b16 %v116, %v115
    %v129 = vpack.c.b16 %v118, %v117
    %v130 = vpack.c.b16 %v120, %v119
    %v131 = vpack.c.b16 %v122, %v121
    %v132 = vpack.c.b16 %v124, %v123
    %141 = vmatprep.subr.bf16.mxu0 0
    %142 = vmatpush1.bf16.msra.mxu0 %v125
    %143 = vmatprep.subr.bf16.mxu0 0
    %144 = vmatpush1.bf16.msra.mxu0 %v126
    %145 = vmatprep.subr.bf16.mxu0 0
    %146 = vmatpush1.bf16.msra.mxu0 %v127
    %147 = vmatprep.subr.bf16.mxu0 0
    %148 = vmatpush1.bf16.msra.mxu0 %v128
    %149 = vmatprep.subr.bf16.mxu0 0
    %150 = vmatpush1.bf16.msra.mxu0 %v129
    %151 = vmatprep.subr.bf16.mxu0 0
    %152 = vmatpush1.bf16.msra.mxu0 %v130
    %153 = vmatprep.subr.bf16.mxu0 0
    %154 = vmatpush1.bf16.msra.mxu0 %v131
    %155 = vmatprep.subr.bf16.mxu0 0
    %156 = vmatpush1.bf16.msra.mxu0 %v132
    %157 = vmatprep.subr.bf16.mxu0 0
    %158 = vmatpush1.bf16.msra.mxu0 0
    %159 = vmatprep.subr.bf16.mxu0 0
    %160 = vmatpush1.bf16.msra.mxu0 0
    %161 = vmatprep.subr.bf16.mxu0 0
    %162 = vmatpush1.bf16.msra.mxu0 0
    %163 = vmatprep.subr.bf16.mxu0 0
    %164 = vmatpush1.bf16.msra.mxu0 0
    %165 = vmatprep.subr.bf16.mxu0 0
    %166 = vmatpush1.bf16.msra.mxu0 0
    %167 = vmatprep.subr.bf16.mxu0 0
    %168 = vmatpush1.bf16.msra.mxu0 0
    %169 = vmatprep.subr.bf16.mxu0 0
    %170 = vmatpush1.bf16.msra.mxu0 0
    %171 = vmatprep.subr.bf16.mxu0 0
    %172 = vmatpush1.bf16.msra.mxu0 0
    %173 = vmatprep.mubr.bf16.mxu0 0
    %174 = vmatmul.mubr.bf16.gmra.mrb[0].mxu0 %v91
    %v175 = vpop.f32.mrb[0].mxu0
    %v176 = vadd.f32 %v86, %v175
    %v177 = vpop.f32.mrb[0].mxu0
    %v178 = vpop.f32.mrb[0].mxu0
    %v179 = vadd.f32 %v86, %v178
    %v180 = vpop.f32.mrb[0].mxu0
    %181 = vdwg.mxu0
    %v182 = vld [vmem:[%s1] sm:$0xf]
    %v183 = vld [vmem:[%s1 + $0x4] sm:$0xf]
    %v184 = vld [vmem:[%s1 + $0x8] sm:$0xf]
    %s185 = scalar_lea.vmem [#allocation2], 64
    %v186 = vld [vmem:[%s185] sm:$0xf]
    %v187 = vld [vmem:[%s185 + $0x4] sm:$0xf]
    %v188 = vld [vmem:[%s185 + $0x8] sm:$0xf]
    %v189 = vld [vmem:[%s185 + $0xc] sm:$0xf]
    %v190 = vld [vmem:[%s185 + $0x10] sm:$0xf]
    %v191 = vld [vmem:[%s185 + $0x14] sm:$0xf]
    %v192 = vld [vmem:[%s185 + $0x18] sm:$0xf]
    %v193 = vld [vmem:[%s185 + $0x1c] sm:$0xf]
    %v194 = vld [vmem:[%s185 + $0x20] sm:$0xf]
    %v195 = vld [vmem:[%s185 + $0x24] sm:$0xf]
    %v196 = vld [vmem:[%s185 + $0x28] sm:$0xf]
    %v197 = vld [vmem:[%s185 + $0x2c] sm:$0xf]
    %v198 = vld [vmem:[%s185 + $0x30] sm:$0xf]
    %v199 = vld [vmem:[%s185 + $0x34] sm:$0xf]
    %v200 = vld [vmem:[%s185 + $0x38] sm:$0xf]
    %v201 = vld [vmem:[%s185 + $0x3c] sm:$0xf]
    %v202 = vld [vmem:[%s9 + $0x1] sm:$0x1]
    %v203 = vlaneseq
    %v204 = vshrl.u32 %v203, 7
    %v205 = vsub.s32 0, %v204
    %v206 = vrot.slane %v202, %v205
    %v210 = vunpack.c.l.b16 %v182
    %v211 = vunpack.c.l.b16 %v183
    %v212 = vunpack.c.l.b16 %v184
    %v213 = vpack.c.b16 %v211, %v210
    %v214 = vpack.c.b16 %v212, %v212
    %v233 = vunpack.c.l.b16 %v186
    %v234 = vunpack.c.l.b16 %v187
    %v235 = vunpack.c.l.b16 %v188
    %v236 = vunpack.c.l.b16 %v189
    %v237 = vunpack.c.l.b16 %v190
    %v238 = vunpack.c.l.b16 %v191
    %v239 = vunpack.c.l.b16 %v192
    %v240 = vunpack.c.l.b16 %v193
    %v241 = vunpack.c.l.b16 %v194
    %v242 = vunpack.c.l.b16 %v195
    %v243 = vunpack.c.l.b16 %v196
    %v244 = vunpack.c.l.b16 %v197
    %v245 = vunpack.c.l.b16 %v198
    %v246 = vunpack.c.l.b16 %v199
    %v247 = vunpack.c.l.b16 %v200
    %v248 = vunpack.c.l.b16 %v201
    %v249 = vpack.c.b16 %v234, %v233
    %v250 = vpack.c.b16 %v236, %v235
    %v251 = vpack.c.b16 %v238, %v237
    %v252 = vpack.c.b16 %v240, %v239
    %v253 = vpack.c.b16 %v242, %v241
    %v254 = vpack.c.b16 %v244, %v243
    %v255 = vpack.c.b16 %v246, %v245
    %v256 = vpack.c.b16 %v248, %v247
    %265 = vmatprep.subr.bf16.mxu0 0
    %266 = vmatpush1.bf16.msra.mxu0 %v249
    %267 = vmatprep.subr.bf16.mxu0 0
    %268 = vmatpush1.bf16.msra.mxu0 %v250
    %269 = vmatprep.subr.bf16.mxu0 0
    %270 = vmatpush1.bf16.msra.mxu0 %v251
    %271 = vmatprep.subr.bf16.mxu0 0
    %272 = vmatpush1.bf16.msra.mxu0 %v252
    %273 = vmatprep.subr.bf16.mxu0 0
    %274 = vmatpush1.bf16.msra.mxu0 %v253
    %275 = vmatprep.subr.bf16.mxu0 0
    %276 = vmatpush1.bf16.msra.mxu0 %v254
    %277 = vmatprep.subr.bf16.mxu0 0
    %278 = vmatpush1.bf16.msra.mxu0 %v255
    %279 = vmatprep.subr.bf16.mxu0 0
    %280 = vmatpush1.bf16.msra.mxu0 %v256
    %281 = vmatprep.subr.bf16.mxu0 0
    %282 = vmatpush1.bf16.msra.mxu0 0
    %283 = vmatprep.subr.bf16.mxu0 0
    %284 = vmatpush1.bf16.msra.mxu0 0
    %285 = vmatprep.subr.bf16.mxu0 0
    %286 = vmatpush1.bf16.msra.mxu0 0
    %287 = vmatprep.subr.bf16.mxu0 0
    %288 = vmatpush1.bf16.msra.mxu0 0
    %289 = vmatprep.subr.bf16.mxu0 0
    %290 = vmatpush1.bf16.msra.mxu0 0
    %291 = vmatprep.subr.bf16.mxu0 0
    %292 = vmatpush1.bf16.msra.mxu0 0
    %293 = vmatprep.subr.bf16.mxu0 0
    %294 = vmatpush1.bf16.msra.mxu0 0
    %295 = vmatprep.subr.bf16.mxu0 0
    %296 = vmatpush1.bf16.msra.mxu0 0
    %297 = vmatprep.mubr.bf16.mxu0 0
    %298 = vmatmul.mubr.bf16.gmra.mrb[0].mxu0 %v213
    %v299 = vpop.f32.mrb[0].mxu0
    %v300 = vadd.f32 %v206, %v299
    %v301 = vpop.f32.mrb[0].mxu0
    %v302 = vpop.f32.mrb[0].mxu0
    %v303 = vadd.f32 %v206, %v302
    %v304 = vpop.f32.mrb[0].mxu0
    %305 = vmatprep.mubr.bf16.mxu0 0
    %306 = vmatmul.mubr.bf16.gmra.mrb[0].mxu0 %v214
    %v307 = vpop.f32.mrb[0].mxu0
    %v308 = vadd.f32 %v206, %v307
    %v309 = vpop.f32.mrb[0].mxu0
    %v310 = vpop.f32.mrb[0].mxu0
    %v311 = vpop.f32.mrb[0].mxu0
    %312 = vdwg.mxu0
    %v313 = vld [vmem:[%s9 + $0x10] sm:$0x1]
    %v314 = vld [vmem:[%s9 + $0x11] sm:$0x1]
    %v315 = vld [vmem:[%s2] sm:$0xff]
    %v316 = vld [vmem:[%s2 + $0x8] sm:$0xff]
    %318 = vset.pattern.permute.xlu0 0
    %319 = vperm.xlu0 %318, %v315
    %v320 = vpop.permute.xlu0 %319
    %323 = vset.pattern.permute.xlu0 0
    %324 = vperm.xlu0 %323, %v316
    %v325 = vpop.permute.xlu0 %324
    %v327 = vlaneseq
    %v328 = vshrl.u32 %v327, 7
    %v329 = vsub.s32 0, %v328
    %v330 = vrot.slane %v313, %v329
    %v331 = vmul.f32 %v320, %v330
    %v332 = vmul.f32 %v325, %v330
    %v333 = vlaneseq
    %v334 = vshrl.u32 %v333, 7
    %v335 = vsub.s32 0, %v334
    %v336 = vrot.slane %v314, %v335
    %v337 = vadd.f32 %v331, %v336
    %v338 = vadd.f32 %v332, %v336
    %v339 = vand.u32 2147483647, %v337
    %vm340 = vcmp.le.f32.partialorder %v339, 0.7853982
    %vm341 = vcmp.lt.s32.totalorder %v337, 0
    %v342 = vand.u32 %v337, 2139095040
    %v343 = vshrl.u32 %v342, 23
    %v344 = vsub.s32 %v343, 127
    %v345 = vand.u32 2147483647, %v337
    %v346 = vand.u32 %v345, 8388607
    %v347 = vor.u32 %v346, 8388608
    %v348 = vsub.s32 0, %v347
    %v349 = vadd.s32 %v344, 1
    %vm350 = vcmp.gt.s32.totalorder %v349, 0
    %v351 = vsel %vm350, %v349, 0
    %v352 = vshrl.u32 %v351, 5
    %v353 = vand.u32 %v351, 31
    %v354 = vsub.s32 32, %v353
    %v355 = vshrl.u32 683565275, %v354
    %v356 = vshll.u32 683565275, %v353
    %v357 = vshrl.u32 2475754826, %v354
    %v358 = vor.u32 %v356, %v357
    %v359 = vshll.u32 2475754826, %v353
    %v360 = vshrl.u32 2131351028, %v354
    %v361 = vor.u32 %v359, %v360
    %v362 = vshll.u32 2131351028, %v353
    %v363 = vshrl.u32 2102212464, %v354
    %v364 = vor.u32 %v362, %v363
    %v365 = vshll.u32 2102212464, %v353
    %v366 = vshrl.u32 920167782, %v354
    %v367 = vor.u32 %v365, %v366
    %v368 = vshll.u32 920167782, %v353
    %v369 = vshrl.u32 1326507024, %v354
    %v370 = vor.u32 %v368, %v369
    %vm371 = vcmp.lt.s32.totalorder %v352, 1
    %vm372 = vcmp.lt.s32.totalorder %v352, 2
    %vm373 = vcmp.lt.s32.totalorder %v352, 3
    %vm374 = vcmp.lt.s32.totalorder %v352, 4
    %v375 = vsel %vm371, %v355, %v358
    %v376 = vsel %vm374, %v364, 2102212464
    %v377 = vsel %vm373, %v361, %v376
    %v378 = vsel %vm372, %v375, %v377
    %v379 = vsel %vm371, %v358, %v361
    %v380 = vsel %vm374, %v367, 920167782
    %v381 = vsel %vm373, %v364, %v380
    %v382 = vsel %vm372, %v379, %v381
    %v383 = vsel %vm371, %v361, %v364
    %v384 = vsel %vm374, %v370, 1326507024
    %v385 = vsel %vm373, %v367, %v384
    %v386 = vsel %vm372, %v383, %v385
    %v387 = vshll.u32 %v347, 8
    %v388 = vmul.u32.u64.compose %v387, %v386
    %v389 = vextract.low.u32 %v388
    %v390 = vextract.high.u32 %v388
    %v391 = vmul.u32.u64.compose %v387, %v382
    %v392 = vextract.low.u32 %v391
    %v393 = vextract.high.u32 %v391
    %v394 = vmul.u32 %v387, %v378
    %v395 = vadd.s32 %v390, %v392
    %vm396 = vc.u32 %v390, %v392
    %v397 = vadd.s32 %v393, 1
    %v398 = vsel %vm396, %v397, %v393
    %v399 = vadd.s32 %v394, %v398
    %v400 = vadd.s32 %v399, 536870912
    %v401 = vshrl.u32 %v400, 30
    %v402 = vshll.u32 %v401, 30
    %v403 = vsub.s32 %v399, %v402
    %vm404 = vcmp.lt.s32.totalorder %v403, 0
    %v405 = vsub.s32 0, %v403
    %v406 = vsel %vm404, %v405, %v403
    %v407 = vclz %v406
    %v408 = vsub.s32 %v407, 2
    %vm409 = vcmp.gt.s32.totalorder 0, %v408
    %v410 = vsel %vm409, 0, %v408
    %v411 = vsub.s32 32, %v410
    %v412 = vshll.u32 %v403, %v410
    %v413 = vshrl.u32 %v395, %v411
    %v414 = vor.u32 %v412, %v413
    %v415 = vsub.s32 4294967266, %v410
    %v416 = vadd.s32 %v415, 127
    %v417 = vshll.u32 %v416, 23
    %v418 = vor.u32 4788187, %v417
    %v419 = vand.u32 2147483647, %v418
    %v421 = vcvt.s32.f32 %v414
    %v422 = vmul.f32 %v421, %v419
    %v423 = vxor.u32 %v422, 2147483648
    %v424 = vsel %vm341, %v423, %v422
    %v425 = vsub.s32 4, %v401
    %v426 = vsel %vm341, %v425, %v401
    %v427 = vsel %vm340, %v337, %v424
    %v428 = vsel %vm340, 0, %v426
    %v429 = vcosq.f32.pop %v427
    %v430 = vsinq.f32.pop %v427
    %vm431 = vweird.f32 %v337
    %v432 = vadd.s32 %v428, 3
    %v433 = vand.u32 %v432, 3
    %vm434 = vcmp.lt.s32.totalorder %v433, 2
    %vm435 = vcmp.eq.s32.totalorder %v433, 0
    %v436 = vxor.u32 %v430, 2147483648
    %v437 = vsel %vm435, %v429, %v436
    %vm438 = vcmp.eq.s32.totalorder %v433, 2
    %v439 = vxor.u32 %v429, 2147483648
    %v440 = vsel %vm438, %v439, %v430
    %v441 = vsel %vm434, %v437, %v440
    %v442 = vsel %vm431, nan, %v441
    %v443 = vand.u32 2147483647, %v338
    %vm444 = vcmp.le.f32.partialorder %v443, 0.7853982
    %vm445 = vcmp.lt.s32.totalorder %v338, 0
    %v446 = vand.u32 %v338, 2139095040
    %v447 = vshrl.u32 %v446, 23
    %v448 = vsub.s32 %v447, 127
    %v449 = vand.u32 2147483647, %v338
    %v450 = vand.u32 %v449, 8388607
    %v451 = vor.u32 %v450, 8388608
    %v452 = vsub.s32 0, %v451
    %v453 = vadd.s32 %v448, 1
    %vm454 = vcmp.gt.s32.totalorder %v453, 0
    %v455 = vsel %vm454, %v453, 0
    %v456 = vshrl.u32 %v455, 5
    %v457 = vand.u32 %v455, 31
    %v458 = vsub.s32 32, %v457
    %v459 = vshrl.u32 683565275, %v458
    %v460 = vshll.u32 683565275, %v457
    %v461 = vshrl.u32 2475754826, %v458
    %v462 = vor.u32 %v460, %v461
    %v463 = vshll.u32 2475754826, %v457
    %v464 = vshrl.u32 2131351028, %v458
    %v465 = vor.u32 %v463, %v464
    %v466 = vshll.u32 2131351028, %v457
    %v467 = vshrl.u32 2102212464, %v458
    %v468 = vor.u32 %v466, %v467
    %v469 = vshll.u32 2102212464, %v457
    %v470 = vshrl.u32 920167782, %v458
    %v471 = vor.u32 %v469, %v470
    %v472 = vshll.u32 920167782, %v457
    %v473 = vshrl.u32 1326507024, %v458
    %v474 = vor.u32 %v472, %v473
    %vm475 = vcmp.lt.s32.totalorder %v456, 1
    %vm476 = vcmp.lt.s32.totalorder %v456, 2
    %vm477 = vcmp.lt.s32.totalorder %v456, 3
    %vm478 = vcmp.lt.s32.totalorder %v456, 4
    %v479 = vsel %vm475, %v459, %v462
    %v480 = vsel %vm478, %v468, 2102212464
    %v481 = vsel %vm477, %v465, %v480
    %v482 = vsel %vm476, %v479, %v481
    %v483 = vsel %vm475, %v462, %v465
    %v484 = vsel %vm478, %v471, 920167782
    %v485 = vsel %vm477, %v468, %v484
    %v486 = vsel %vm476, %v483, %v485
    %v487 = vsel %vm475, %v465, %v468
    %v488 = vsel %vm478, %v474, 1326507024
    %v489 = vsel %vm477, %v471, %v488
    %v490 = vsel %vm476, %v487, %v489
    %v491 = vshll.u32 %v451, 8
    %v492 = vmul.u32.u64.compose %v491, %v490
    %v493 = vextract.low.u32 %v492
    %v494 = vextract.high.u32 %v492
    %v495 = vmul.u32.u64.compose %v491, %v486
    %v496 = vextract.low.u32 %v495
    %v497 = vextract.high.u32 %v495
    %v498 = vmul.u32 %v491, %v482
    %v499 = vadd.s32 %v494, %v496
    %vm500 = vc.u32 %v494, %v496
    %v501 = vadd.s32 %v497, 1
    %v502 = vsel %vm500, %v501, %v497
    %v503 = vadd.s32 %v498, %v502
    %v504 = vadd.s32 %v503, 536870912
    %v505 = vshrl.u32 %v504, 30
    %v506 = vshll.u32 %v505, 30
    %v507 = vsub.s32 %v503, %v506
    %vm508 = vcmp.lt.s32.totalorder %v507, 0
    %v509 = vsub.s32 0, %v507
    %v510 = vsel %vm508, %v509, %v507
    %v511 = vclz %v510
    %v512 = vsub.s32 %v511, 2
    %vm513 = vcmp.gt.s32.totalorder 0, %v512
    %v514 = vsel %vm513, 0, %v512
    %v515 = vsub.s32 32, %v514
    %v516 = vshll.u32 %v507, %v514
    %v517 = vshrl.u32 %v499, %v515
    %v518 = vor.u32 %v516, %v517
    %v519 = vsub.s32 4294967266, %v514
    %v520 = vadd.s32 %v519, 127
    %v521 = vshll.u32 %v520, 23
    %v522 = vor.u32 4788187, %v521
    %v523 = vand.u32 2147483647, %v522
    %v525 = vcvt.s32.f32 %v518
    %v526 = vmul.f32 %v525, %v523
    %v527 = vxor.u32 %v526, 2147483648
    %v528 = vsel %vm445, %v527, %v526
    %v529 = vsub.s32 4, %v505
    %v530 = vsel %vm445, %v529, %v505
    %v531 = vsel %vm444, %v338, %v528
    %v532 = vsel %vm444, 0, %v530
    %v533 = vcosq.f32.pop %v531
    %v534 = vsinq.f32.pop %v531
    %vm535 = vweird.f32 %v338
    %v536 = vadd.s32 %v532, 3
    %v537 = vand.u32 %v536, 3
    %vm538 = vcmp.lt.s32.totalorder %v537, 2
    %vm539 = vcmp.eq.s32.totalorder %v537, 0
    %v540 = vxor.u32 %v534, 2147483648
    %v541 = vsel %vm539, %v533, %v540
    %vm542 = vcmp.eq.s32.totalorder %v537, 2
    %v543 = vxor.u32 %v533, 2147483648
    %v544 = vsel %vm542, %v543, %v534
    %v545 = vsel %vm538, %v541, %v544
    %v546 = vsel %vm535, nan, %v545
    %v547 = vpack.c.bf16 %v546, %v442
    %s548 = scalar_lea.vmem [#allocation2], 128
    %v549 = vld [vmem:[%s548] sm:$0xf]
    %v550 = vld [vmem:[%s548 + $0x4] sm:$0xf]
    %v551 = vld [vmem:[%s548 + $0x8] sm:$0xf]
    %v552 = vld [vmem:[%s548 + $0xc] sm:$0xf]
    %v553 = vld [vmem:[%s548 + $0x10] sm:$0xf]
    %v554 = vld [vmem:[%s548 + $0x14] sm:$0xf]
    %v555 = vld [vmem:[%s548 + $0x18] sm:$0xf]
    %v556 = vld [vmem:[%s548 + $0x1c] sm:$0xf]
    %v557 = vld [vmem:[%s548 + $0x20] sm:$0xf]
    %v558 = vld [vmem:[%s548 + $0x24] sm:$0xf]
    %v559 = vld [vmem:[%s548 + $0x28] sm:$0xf]
    %v560 = vld [vmem:[%s548 + $0x2c] sm:$0xf]
    %v561 = vld [vmem:[%s548 + $0x30] sm:$0xf]
    %v562 = vld [vmem:[%s548 + $0x34] sm:$0xf]
    %v563 = vld [vmem:[%s548 + $0x38] sm:$0xf]
    %v564 = vld [vmem:[%s548 + $0x3c] sm:$0xf]
    %v581 = vunpack.c.l.b16 %v549
    %v582 = vunpack.c.l.b16 %v550
    %v583 = vunpack.c.l.b16 %v551
    %v584 = vunpack.c.l.b16 %v552
    %v585 = vunpack.c.l.b16 %v553
    %v586 = vunpack.c.l.b16 %v554
    %v587 = vunpack.c.l.b16 %v555
    %v588 = vunpack.c.l.b16 %v556
    %v589 = vunpack.c.l.b16 %v557
    %v590 = vunpack.c.l.b16 %v558
    %v591 = vunpack.c.l.b16 %v559
    %v592 = vunpack.c.l.b16 %v560
    %v593 = vunpack.c.l.b16 %v561
    %v594 = vunpack.c.l.b16 %v562
    %v595 = vunpack.c.l.b16 %v563
    %v596 = vunpack.c.l.b16 %v564
    %v597 = vpack.c.b16 %v582, %v581
    %v598 = vpack.c.b16 %v584, %v583
    %v599 = vpack.c.b16 %v586, %v585
    %v600 = vpack.c.b16 %v588, %v587
    %v601 = vpack.c.b16 %v590, %v589
    %v602 = vpack.c.b16 %v592, %v591
    %v603 = vpack.c.b16 %v594, %v593
    %v604 = vpack.c.b16 %v596, %v595
    %613 = vmatprep.subr.bf16.mxu0 0
    %614 = vmatpush1.bf16.msra.mxu0 %v597
    %615 = vmatprep.subr.bf16.mxu0 0
    %616 = vmatpush1.bf16.msra.mxu0 %v598
    %617 = vmatprep.subr.bf16.mxu0 0
    %618 = vmatpush1.bf16.msra.mxu0 %v599
    %619 = vmatprep.subr.bf16.mxu0 0
    %620 = vmatpush1.bf16.msra.mxu0 %v600
    %621 = vmatprep.subr.bf16.mxu0 0
    %622 = vmatpush1.bf16.msra.mxu0 %v601
    %623 = vmatprep.subr.bf16.mxu0 0
    %624 = vmatpush1.bf16.msra.mxu0 %v602
    %625 = vmatprep.subr.bf16.mxu0 0
    %626 = vmatpush1.bf16.msra.mxu0 %v603
    %627 = vmatprep.subr.bf16.mxu0 0
    %628 = vmatpush1.bf16.msra.mxu0 %v604
    %629 = vmatprep.subr.bf16.mxu0 0
    %630 = vmatpush1.bf16.msra.mxu0 0
    %631 = vmatprep.subr.bf16.mxu0 0
    %632 = vmatpush1.bf16.msra.mxu0 0
    %633 = vmatprep.subr.bf16.mxu0 0
    %634 = vmatpush1.bf16.msra.mxu0 0
    %635 = vmatprep.subr.bf16.mxu0 0
    %636 = vmatpush1.bf16.msra.mxu0 0
    %637 = vmatprep.subr.bf16.mxu0 0
    %638 = vmatpush1.bf16.msra.mxu0 0
    %639 = vmatprep.subr.bf16.mxu0 0
    %640 = vmatpush1.bf16.msra.mxu0 0
    %641 = vmatprep.subr.bf16.mxu0 0
    %642 = vmatpush1.bf16.msra.mxu0 0
    %643 = vmatprep.subr.bf16.mxu0 0
    %644 = vmatpush1.bf16.msra.mxu0 0
    %645 = vmatprep.mubr.bf16.mxu0 0
    %646 = vmatmul.mubr.bf16.gmra.mrb[0].mxu0 %v547
    %v647 = vpop.f32.mrb[0].mxu0
    %v648 = vadd.f32 0.0, %v647
    %v649 = vpop.f32.mrb[0].mxu0
    %v650 = vpop.f32.mrb[0].mxu0
    %v651 = vadd.f32 0.0, %v650
    %v652 = vpop.f32.mrb[0].mxu0
    %653 = vdwg.mxu0
    %v654 = vadd.f32 %v176, %v648
    %v655 = vadd.f32 %v179, %v651
    %v656 = vld [vmem:[%s9 + $0x2] sm:$0x1]
    %v657 = vlaneseq
    %v658 = vshrl.u32 %v657, 7
    %v659 = vsub.s32 0, %v658
    %v660 = vrot.slane %v656, %v659
    %v661 = vadd.f32 %v654, %v660
    %v662 = vadd.f32 %v655, %v660
    %v663 = vld [vmem:[%s9 + $0x12] sm:$0x1]
    %v664 = vpack.c.bf16 %v662, %v661
    %v665 = vpack.c.bf16 %v303, %v300
    %v666 = vpack.c.bf16 %v308, %v308
    %v667 = vld [vmem:[%s4] sm:$0xf]
    %v668 = vld [vmem:[%s4 + $0x4] sm:$0xf]
    %v671 = vunpack.c.l.b16 %v667
    %v672 = vunpack.c.l.b16 %v668
    %v673 = vpack.c.b16 %v672, %v671
    %vm674 = vcmask 195584
    %v676 = vsel %vm674, %v673, 0
    %vm678 = vcmask 1043456
    %v680 = vsel %vm678, %v666, 0
    %682 = vmatprep.subr.bf16.mxu0 0
    %683 = vmatpush1.bf16.msra.mxu0 %v665
    %684 = vmatprep.subr.bf16.mxu0 0
    %685 = vmatpush1.bf16.msra.mxu0 %v680
    %686 = vmatprep.subr.bf16.mxu0 0
    %687 = vmatpush1.bf16.msra.mxu0 0
    %688 = vmatprep.subr.bf16.mxu0 0
    %689 = vmatpush1.bf16.msra.mxu0 0
    %690 = vmatprep.subr.bf16.mxu0 0
    %691 = vmatpush1.bf16.msra.mxu0 0
    %692 = vmatprep.subr.bf16.mxu0 0
    %693 = vmatpush1.bf16.msra.mxu0 0
    %694 = vmatprep.subr.bf16.mxu0 0
    %695 = vmatpush1.bf16.msra.mxu0 0
    %696 = vmatprep.subr.bf16.mxu0 0
    %697 = vmatpush1.bf16.msra.mxu0 0
    %698 = vmatprep.subr.bf16.mxu0 0
    %699 = vmatpush1.bf16.msra.mxu0 0
    %700 = vmatprep.subr.bf16.mxu0 0
    %701 = vmatpush1.bf16.msra.mxu0 0
    %702 = vmatprep.subr.bf16.mxu0 0
    %703 = vmatpush1.bf16.msra.mxu0 0
    %704 = vmatprep.subr.bf16.mxu0 0
    %705 = vmatpush1.bf16.msra.mxu0 0
    %706 = vmatprep.subr.bf16.mxu0 0
    %707 = vmatpush1.bf16.msra.mxu0 0
    %708 = vmatprep.subr.bf16.mxu0 0
    %709 = vmatpush1.bf16.msra.mxu0 0
    %710 = vmatprep.subr.bf16.mxu0 0
    %711 = vmatpush1.bf16.msra.mxu0 0
    %712 = vmatprep.subr.bf16.mxu0 0
    %713 = vmatpush1.bf16.msra.mxu0 0
    %714 = vmatprep.mubr.bf16.mxu0 0
    %715 = vmatmul.mubr.bf16.gmra.mrb[0].mxu0 %v676
    %v716 = vpop.f32.mrb[0].mxu0
    %v717 = vadd.f32 0.0, %v716
    %v718 = vpop.f32.mrb[0].mxu0
    %v719 = vpop.f32.mrb[0].mxu0
    %v720 = vadd.f32 0.0, %v719
    %v721 = vpop.f32.mrb[0].mxu0
    %722 = vdwg.mxu0
    %v723 = vld [vmem:[%s6] sm:$0xff]
    %v724 = vld [vmem:[%s6 + $0x8] sm:$0xff]
    %726 = vset.pattern.permute.xlu0 0
    %727 = vperm.xlu0 %726, %v723
    %v728 = vpop.permute.xlu0 %727
    %731 = vset.pattern.permute.xlu0 0
    %732 = vperm.xlu0 %731, %v724
    %v733 = vpop.permute.xlu0 %732
    %v735 = vmul.f32 %v717, %v728
    %v736 = vmul.f32 %v720, %v733
    %v737 = vpack.c.bf16 %v736, %v735
    %s738 = scalar_lea.vmem [#allocation4], 128
    %v739 = vld [vmem:[%s738] sm:$0xf]
    %v740 = vld [vmem:[%s738 + $0x4] sm:$0xf]
    %v741 = vld [vmem:[%s738 + $0x8] sm:$0xf]
    %v742 = vld [vmem:[%s738 + $0xc] sm:$0xf]
    %v743 = vld [vmem:[%s738 + $0x10] sm:$0xf]
    %v744 = vld [vmem:[%s738 + $0x14] sm:$0xf]
    %v745 = vld [vmem:[%s738 + $0x18] sm:$0xf]
    %v746 = vld [vmem:[%s738 + $0x1c] sm:$0xf]
    %v747 = vld [vmem:[%s738 + $0x20] sm:$0xf]
    %v748 = vld [vmem:[%s738 + $0x24] sm:$0xf]
    %v749 = vld [vmem:[%s738 + $0x28] sm:$0xf]
    %v750 = vld [vmem:[%s738 + $0x2c] sm:$0xf]
    %v751 = vld [vmem:[%s738 + $0x30] sm:$0xf]
    %v752 = vld [vmem:[%s738 + $0x34] sm:$0xf]
    %v753 = vld [vmem:[%s738 + $0x38] sm:$0xf]
    %v754 = vld [vmem:[%s738 + $0x3c] sm:$0xf]
    %v755 = vld [vmem:[%s738 + $0x40] sm:$0xf]
    %v756 = vld [vmem:[%s738 + $0x44] sm:$0xf]
    %v757 = vld [vmem:[%s738 + $0x48] sm:$0xf]
    %v758 = vld [vmem:[%s738 + $0x4c] sm:$0xf]
    %v759 = vld [vmem:[%s738 + $0x50] sm:$0xf]
    %v760 = vld [vmem:[%s738 + $0x54] sm:$0xf]
    %v761 = vld [vmem:[%s738 + $0x58] sm:$0xf]
    %v762 = vld [vmem:[%s738 + $0x5c] sm:$0xf]
    %v763 = vld [vmem:[%s738 + $0x60] sm:$0xf]
    %v764 = vld [vmem:[%s738 + $0x64] sm:$0xf]
    %v765 = vld [vmem:[%s738 + $0x68] sm:$0xf]
    %v766 = vld [vmem:[%s738 + $0x6c] sm:$0xf]
    %v767 = vld [vmem:[%s738 + $0x70] sm:$0xf]
    %v768 = vld [vmem:[%s738 + $0x74] sm:$0xf]
    %v769 = vld [vmem:[%s738 + $0x78] sm:$0xf]
    %v770 = vld [vmem:[%s738 + $0x7c] sm:$0xf]
    %v771 = vld [vmem:[%s9 + $0x4] sm:$0x1]
    %v772 = vlaneseq
    %v773 = vshrl.u32 %v772, 7
    %v774 = vsub.s32 0, %v773
    %v775 = vrot.slane %v771, %v774
    %v808 = vunpack.c.l.b16 %v739
    %v809 = vunpack.c.l.b16 %v740
    %v810 = vunpack.c.l.b16 %v741
    %v811 = vunpack.c.l.b16 %v742
    %v812 = vunpack.c.l.b16 %v743
    %v813 = vunpack.c.l.b16 %v744
    %v814 = vunpack.c.l.b16 %v745
    %v815 = vunpack.c.l.b16 %v746
    %v816 = vunpack.c.l.b16 %v747
    %v817 = vunpack.c.l.b16 %v748
    %v818 = vunpack.c.l.b16 %v749
    %v819 = vunpack.c.l.b16 %v750
    %v820 = vunpack.c.l.b16 %v751
    %v821 = vunpack.c.l.b16 %v752
    %v822 = vunpack.c.l.b16 %v753
    %v823 = vunpack.c.l.b16 %v754
    %v824 = vunpack.c.l.b16 %v755
    %v825 = vunpack.c.l.b16 %v756
    %v826 = vunpack.c.l.b16 %v757
    %v827 = vunpack.c.l.b16 %v758
    %v828 = vunpack.c.l.b16 %v759
    %v829 = vunpack.c.l.b16 %v760
    %v830 = vunpack.c.l.b16 %v761
    %v831 = vunpack.c.l.b16 %v762
    %v832 = vunpack.c.l.b16 %v763
    %v833 = vunpack.c.l.b16 %v764
    %v834 = vunpack.c.l.b16 %v765
    %v835 = vunpack.c.l.b16 %v766
    %v836 = vunpack.c.l.b16 %v767
    %v837 = vunpack.c.l.b16 %v768
    %v838 = vunpack.c.l.b16 %v769
    %v839 = vunpack.c.l.b16 %v770
    %v840 = vpack.c.b16 %v809, %v808
    %v841 = vpack.c.b16 %v811, %v810
    %v842 = vpack.c.b16 %v813, %v812
    %v843 = vpack.c.b16 %v815, %v814
    %v844 = vpack.c.b16 %v817, %v816
    %v845 = vpack.c.b16 %v819, %v818
    %v846 = vpack.c.b16 %v821, %v820
    %v847 = vpack.c.b16 %v823, %v822
    %v848 = vpack.c.b16 %v825, %v824
    %v849 = vpack.c.b16 %v827, %v826
    %v850 = vpack.c.b16 %v829, %v828
    %v851 = vpack.c.b16 %v831, %v830
    %v852 = vpack.c.b16 %v833, %v832
    %v853 = vpack.c.b16 %v835, %v834
    %v854 = vpack.c.b16 %v837, %v836
    %v855 = vpack.c.b16 %v839, %v838
    %872 = vmatprep.subr.bf16.mxu0 0
    %873 = vmatpush1.bf16.msra.mxu0 %v840
    %874 = vmatprep.subr.bf16.mxu0 0
    %875 = vmatpush1.bf16.msra.mxu0 %v841
    %876 = vmatprep.subr.bf16.mxu0 0
    %877 = vmatpush1.bf16.msra.mxu0 %v842
    %878 = vmatprep.subr.bf16.mxu0 0
    %879 = vmatpush1.bf16.msra.mxu0 %v843
    %880 = vmatprep.subr.bf16.mxu0 0
    %881 = vmatpush1.bf16.msra.mxu0 %v844
    %882 = vmatprep.subr.bf16.mxu0 0
    %883 = vmatpush1.bf16.msra.mxu0 %v845
    %884 = vmatprep.subr.bf16.mxu0 0
    %885 = vmatpush1.bf16.msra.mxu0 %v846
    %886 = vmatprep.subr.bf16.mxu0 0
    %887 = vmatpush1.bf16.msra.mxu0 %v847
    %888 = vmatprep.subr.bf16.mxu0 0
    %889 = vmatpush1.bf16.msra.mxu0 %v848
    %890 = vmatprep.subr.bf16.mxu0 0
    %891 = vmatpush1.bf16.msra.mxu0 %v849
    %892 = vmatprep.subr.bf16.mxu0 0
    %893 = vmatpush1.bf16.msra.mxu0 %v850
    %894 = vmatprep.subr.bf16.mxu0 0
    %895 = vmatpush1.bf16.msra.mxu0 %v851
    %896 = vmatprep.subr.bf16.mxu0 0
    %897 = vmatpush1.bf16.msra.mxu0 %v852
    %898 = vmatprep.subr.bf16.mxu0 0
    %899 = vmatpush1.bf16.msra.mxu0 %v853
    %900 = vmatprep.subr.bf16.mxu0 0
    %901 = vmatpush1.bf16.msra.mxu0 %v854
    %902 = vmatprep.subr.bf16.mxu0 0
    %903 = vmatpush1.bf16.msra.mxu0 %v855
    %904 = vmatprep.mubr.bf16.mxu0 %v664
    %905 = vmatmul.mubr.bf16.gmra.mrb[0].mxu0 %v737
    %v906 = vpop.f32.mrb[0].mxu0
    %v907 = vadd.f32 %v775, %v906
    %v908 = vpop.f32.mrb[0].mxu0
    %v909 = vpop.f32.mrb[0].mxu0
    %v910 = vadd.f32 %v775, %v909
    %v911 = vpop.f32.mrb[0].mxu0
    %912 = vdwg.mxu0
    %913 = vadd.xlane.f32.xlu0 %v907
    %v914 = vpop.xlane.xlu0 %913
    %915 = vadd.xlane.f32.xlu0 %v910
    %v916 = vpop.xlane.xlu0 %915
    %v917 = vmul.f32 %v914, 0.03125
    %v918 = vmul.f32 %v916, 0.03125
    %v919 = vsub.f32 %v907, %v917
    %v920 = vsub.f32 %v910, %v918
    %v921 = vlaneseq
    %v922 = vshrl.u32 %v921, 7
    %v923 = vsub.s32 0, %v922
    %v924 = vrot.slane %v663, %v923
    %v925 = vmul.f32 %v919, %v924
    %v926 = vmul.f32 %v920, %v924
    %v927 = vmul.f32 %v925, %v925
    %v928 = vmul.f32 %v926, %v926
    %929 = vadd.xlane.f32.xlu0 %v927
    %v930 = vpop.xlane.xlu0 %929
    %931 = vadd.xlane.f32.xlu0 %v928
    %v932 = vpop.xlane.xlu0 %931
    %v933 = vmul.f32 %v930, 0.03125
    %v934 = vmul.f32 %v932, 0.03125
    %v935 = vadd.f32 %v933, 1e-05
    %v936 = vadd.f32 %v934, 1e-05
    %v937 = vrsqrt.pop %v935
    %v938 = vrsqrt.pop %v936
    %v939 = vmul.f32 %v925, %v937
    %v940 = vmul.f32 %v926, %v938
    %v941 = vld [vmem:[%s9 + $0x5] sm:$0x1]
    %v942 = vlaneseq
    %v943 = vshrl.u32 %v942, 7
    %v944 = vsub.s32 0, %v943
    %v945 = vrot.slane %v941, %v944
    %v946 = vmul.f32 %v939, %v945
    %v947 = vmul.f32 %v940, %v945
    %v948 = vld [vmem:[%s9 + $0x6] sm:$0x1]
    %v949 = vlaneseq
    %v950 = vshrl.u32 %v949, 7
    %v951 = vsub.s32 0, %v950
    %v952 = vrot.slane %v948, %v951
    %v953 = vadd.f32 %v946, %v952
    %v954 = vadd.f32 %v947, %v952
    %v955 = vmax.f32 %v953, 0.0
    %v956 = vmax.f32 %v954, 0.0
    %v957 = vld [vmem:[%s3] sm:$0xf]
    %v958 = vld [vmem:[%s3 + $0x4] sm:$0xf]
    %v959 = vld [vmem:[%s3 + $0x8] sm:$0xf]
    %v963 = vunpack.c.l.b16 %v957
    %v964 = vunpack.c.l.b16 %v958
    %v965 = vunpack.c.l.b16 %v959
    %v966 = vpack.c.b16 %v964, %v963
    %v967 = vpack.c.b16 %v965, %v965
    %vm968 = vcmask 130048
    %v970 = vsel %vm968, %v966, 0
    %v973 = vsel %vm968, %v967, 0
    %975 = vmatprep.subr.bf16.mxu0 0
    %976 = vmatpush1.bf16.msra.mxu0 %v664
    %977 = vmatprep.subr.bf16.mxu0 0
    %978 = vmatpush1.bf16.msra.mxu0 0
    %979 = vmatprep.subr.bf16.mxu0 0
    %980 = vmatpush1.bf16.msra.mxu0 0
    %981 = vmatprep.subr.bf16.mxu0 0
    %982 = vmatpush1.bf16.msra.mxu0 0
    %983 = vmatprep.subr.bf16.mxu0 0
    %984 = vmatpush1.bf16.msra.mxu0 0
    %985 = vmatprep.subr.bf16.mxu0 0
    %986 = vmatpush1.bf16.msra.mxu0 0
    %987 = vmatprep.subr.bf16.mxu0 0
    %988 = vmatpush1.bf16.msra.mxu0 0
    %989 = vmatprep.subr.bf16.mxu0 0
    %990 = vmatpush1.bf16.msra.mxu0 0
    %991 = vmatprep.subr.bf16.mxu0 0
    %992 = vmatpush1.bf16.msra.mxu0 0
    %993 = vmatprep.subr.bf16.mxu0 0
    %994 = vmatpush1.bf16.msra.mxu0 0
    %995 = vmatprep.subr.bf16.mxu0 0
    %996 = vmatpush1.bf16.msra.mxu0 0
    %997 = vmatprep.subr.bf16.mxu0 0
    %998 = vmatpush1.bf16.msra.mxu0 0
    %999 = vmatprep.subr.bf16.mxu0 0
    %1000 = vmatpush1.bf16.msra.mxu0 0
    %1001 = vmatprep.subr.bf16.mxu0 0
    %1002 = vmatpush1.bf16.msra.mxu0 0
    %1003 = vmatprep.subr.bf16.mxu0 0
    %1004 = vmatpush1.bf16.msra.mxu0 0
    %1005 = vmatprep.subr.bf16.mxu0 0
    %1006 = vmatpush1.bf16.msra.mxu0 0
    %1007 = vmatprep.mubr.bf16.mxu0 0
    %1008 = vmatmul.mubr.bf16.gmra.mrb[0].mxu0 %v970
    %v1009 = vpop.f32.mrb[0].mxu0
    %v1010 = vadd.f32 0.0, %v1009
    %v1011 = vpop.f32.mrb[0].mxu0
    %v1012 = vpop.f32.mrb[0].mxu0
    %v1013 = vadd.f32 0.0, %v1012
    %v1014 = vpop.f32.mrb[0].mxu0
    %1015 = vmatprep.mubr.bf16.mxu0 0
    %1016 = vmatmul.mubr.bf16.gmra.mrb[0].mxu0 %v973
    %v1017 = vpop.f32.mrb[0].mxu0
    %v1018 = vadd.f32 0.0, %v1017
    %v1019 = vpop.f32.mrb[0].mxu0
    %v1020 = vpop.f32.mrb[0].mxu0
    %v1021 = vpop.f32.mrb[0].mxu0
    %1022 = vdwg.mxu0
    %v1023 = vld [vmem:[%s5] sm:$0xff]
    %v1024 = vld [vmem:[%s5 + $0x8] sm:$0xff]
    %v1025 = vld [vmem:[%s5 + $0x10] sm:$0xff]
    %1027 = vset.pattern.permute.xlu0 0
    %1028 = vperm.xlu0 %1027, %v1023
    %v1029 = vpop.permute.xlu0 %1028
    %1032 = vset.pattern.permute.xlu0 0
    %1033 = vperm.xlu0 %1032, %v1024
    %v1034 = vpop.permute.xlu0 %1033
    %1037 = vset.pattern.permute.xlu0 0
    %1038 = vperm.xlu0 %1037, %v1025
    %v1039 = vpop.permute.xlu0 %1038
    %v1041 = vmul.f32 %v1010, %v1029
    %v1042 = vmul.f32 %v1013, %v1034
    %v1043 = vmul.f32 %v1018, %v1039
    %v1044 = vpack.c.bf16 %v1042, %v1041
    %v1045 = vpack.c.bf16 %v1043, %v1043
    %v1046 = vld [vmem:[#allocation4] sm:$0xf]
    %v1047 = vld [vmem:[#allocation4 + $0x4] sm:$0xf]
    %v1048 = vld [vmem:[#allocation4 + $0x8] sm:$0xf]
    %v1049 = vld [vmem:[#allocation4 + $0xc] sm:$0xf]
    %v1050 = vld [vmem:[#allocation4 + $0x10] sm:$0xf]
    %v1051 = vld [vmem:[#allocation4 + $0x14] sm:$0xf]
    %v1052 = vld [vmem:[#allocation4 + $0x18] sm:$0xf]
    %v1053 = vld [vmem:[#allocation4 + $0x1c] sm:$0xf]
    %v1054 = vld [vmem:[#allocation4 + $0x20] sm:$0xf]
    %v1055 = vld [vmem:[#allocation4 + $0x24] sm:$0xf]
    %v1056 = vld [vmem:[#allocation4 + $0x28] sm:$0xf]
    %v1057 = vld [vmem:[#allocation4 + $0x2c] sm:$0xf]
    %v1058 = vld [vmem:[#allocation4 + $0x30] sm:$0xf]
    %v1059 = vld [vmem:[#allocation4 + $0x34] sm:$0xf]
    %v1060 = vld [vmem:[#allocation4 + $0x38] sm:$0xf]
    %v1061 = vld [vmem:[#allocation4 + $0x3c] sm:$0xf]
    %v1062 = vld [vmem:[#allocation4 + $0x40] sm:$0xf]
    %v1063 = vld [vmem:[#allocation4 + $0x44] sm:$0xf]
    %v1064 = vld [vmem:[#allocation4 + $0x48] sm:$0xf]
    %v1065 = vld [vmem:[#allocation4 + $0x4c] sm:$0xf]
    %v1066 = vld [vmem:[#allocation4 + $0x50] sm:$0xf]
    %v1067 = vld [vmem:[#allocation4 + $0x54] sm:$0xf]
    %v1068 = vld [vmem:[#allocation4 + $0x58] sm:$0xf]
    %v1069 = vld [vmem:[#allocation4 + $0x5c] sm:$0xf]
    %v1070 = vld [vmem:[#allocation4 + $0x60] sm:$0xf]
    %v1071 = vld [vmem:[#allocation4 + $0x64] sm:$0xf]
    %v1072 = vld [vmem:[#allocation4 + $0x68] sm:$0xf]
    %v1073 = vld [vmem:[#allocation4 + $0x6c] sm:$0xf]
    %v1074 = vld [vmem:[#allocation4 + $0x70] sm:$0xf]
    %v1075 = vld [vmem:[#allocation4 + $0x74] sm:$0xf]
    %v1076 = vld [vmem:[#allocation4 + $0x78] sm:$0xf]
    %v1077 = vld [vmem:[#allocation4 + $0x7c] sm:$0xf]
    %v1078 = vld [vmem:[%s9 + $0x3] sm:$0x1]
    %v1079 = vlaneseq
    %v1080 = vshrl.u32 %v1079, 7
    %v1081 = vsub.s32 0, %v1080
    %v1082 = vrot.slane %v1078, %v1081
    %v1115 = vunpack.c.l.b16 %v1046
    %v1116 = vunpack.c.l.b16 %v1047
    %v1117 = vunpack.c.l.b16 %v1048
    %v1118 = vunpack.c.l.b16 %v1049
    %v1119 = vunpack.c.l.b16 %v1050
    %v1120 = vunpack.c.l.b16 %v1051
    %v1121 = vunpack.c.l.b16 %v1052
    %v1122 = vunpack.c.l.b16 %v1053
    %v1123 = vunpack.c.l.b16 %v1054
    %v1124 = vunpack.c.l.b16 %v1055
    %v1125 = vunpack.c.l.b16 %v1056
    %v1126 = vunpack.c.l.b16 %v1057
    %v1127 = vunpack.c.l.b16 %v1058
    %v1128 = vunpack.c.l.b16 %v1059
    %v1129 = vunpack.c.l.b16 %v1060
    %v1130 = vunpack.c.l.b16 %v1061
    %v1131 = vunpack.c.l.b16 %v1062
    %v1132 = vunpack.c.l.b16 %v1063
    %v1133 = vunpack.c.l.b16 %v1064
    %v1134 = vunpack.c.l.b16 %v1065
    %v1135 = vunpack.c.l.b16 %v1066
    %v1136 = vunpack.c.l.b16 %v1067
    %v1137 = vunpack.c.l.b16 %v1068
    %v1138 = vunpack.c.l.b16 %v1069
    %v1139 = vunpack.c.l.b16 %v1070
    %v1140 = vunpack.c.l.b16 %v1071
    %v1141 = vunpack.c.l.b16 %v1072
    %v1142 = vunpack.c.l.b16 %v1073
    %v1143 = vunpack.c.l.b16 %v1074
    %v1144 = vunpack.c.l.b16 %v1075
    %v1145 = vunpack.c.l.b16 %v1076
    %v1146 = vunpack.c.l.b16 %v1077
    %v1147 = vpack.c.b16 %v1116, %v1115
    %v1148 = vpack.c.b16 %v1118, %v1117
    %v1149 = vpack.c.b16 %v1120, %v1119
    %v1150 = vpack.c.b16 %v1122, %v1121
    %v1151 = vpack.c.b16 %v1124, %v1123
    %v1152 = vpack.c.b16 %v1126, %v1125
    %v1153 = vpack.c.b16 %v1128, %v1127
    %v1154 = vpack.c.b16 %v1130, %v1129
    %v1155 = vpack.c.b16 %v1132, %v1131
    %v1156 = vpack.c.b16 %v1134, %v1133
    %v1157 = vpack.c.b16 %v1136, %v1135
    %v1158 = vpack.c.b16 %v1138, %v1137
    %v1159 = vpack.c.b16 %v1140, %v1139
    %v1160 = vpack.c.b16 %v1142, %v1141
    %v1161 = vpack.c.b16 %v1144, %v1143
    %v1162 = vpack.c.b16 %v1146, %v1145
    %1179 = vmatprep.subr.bf16.mxu0 0
    %1180 = vmatpush1.bf16.msra.mxu0 %v1147
    %1181 = vmatprep.subr.bf16.mxu0 0
    %1182 = vmatpush1.bf16.msra.mxu0 %v1148
    %1183 = vmatprep.subr.bf16.mxu0 0
    %1184 = vmatpush1.bf16.msra.mxu0 %v1149
    %1185 = vmatprep.subr.bf16.mxu0 0
    %1186 = vmatpush1.bf16.msra.mxu0 %v1150
    %1187 = vmatprep.subr.bf16.mxu0 0
    %1188 = vmatpush1.bf16.msra.mxu0 %v1151
    %1189 = vmatprep.subr.bf16.mxu0 0
    %1190 = vmatpush1.bf16.msra.mxu0 %v1152
    %1191 = vmatprep.subr.bf16.mxu0 0
    %1192 = vmatpush1.bf16.msra.mxu0 %v1153
    %1193 = vmatprep.subr.bf16.mxu0 0
    %1194 = vmatpush1.bf16.msra.mxu0 %v1154
    %1195 = vmatprep.subr.bf16.mxu0 0
    %1196 = vmatpush1.bf16.msra.mxu0 %v1155
    %1197 = vmatprep.subr.bf16.mxu0 0
    %1198 = vmatpush1.bf16.msra.mxu0 %v1156
    %1199 = vmatprep.subr.bf16.mxu0 0
    %1200 = vmatpush1.bf16.msra.mxu0 %v1157
    %1201 = vmatprep.subr.bf16.mxu0 0
    %1202 = vmatpush1.bf16.msra.mxu0 %v1158
    %1203 = vmatprep.subr.bf16.mxu0 0
    %1204 = vmatpush1.bf16.msra.mxu0 %v1159
    %1205 = vmatprep.subr.bf16.mxu0 0
    %1206 = vmatpush1.bf16.msra.mxu0 %v1160
    %1207 = vmatprep.subr.bf16.mxu0 0
    %1208 = vmatpush1.bf16.msra.mxu0 %v1161
    %1209 = vmatprep.subr.bf16.mxu0 0
    %1210 = vmatpush1.bf16.msra.mxu0 %v1162
    %1211 = vmatprep.mubr.bf16.mxu0 %v665
    %1212 = vmatmul.mubr.bf16.gmra.mrb[0].mxu0 %v1044
    %v1213 = vpop.f32.mrb[0].mxu0
    %v1214 = vadd.f32 %v1082, %v1213
    %v1215 = vpop.f32.mrb[0].mxu0
    %v1216 = vpop.f32.mrb[0].mxu0
    %v1217 = vadd.f32 %v1082, %v1216
    %v1218 = vpop.f32.mrb[0].mxu0
    %1219 = vmatprep.mubr.bf16.mxu0 %v666
    %1220 = vmatmul.mubr.bf16.gmra.mrb[0].mxu0 %v1045
    %v1221 = vpop.f32.mrb[0].mxu0
    %v1222 = vadd.f32 %v1082, %v1221
    %v1223 = vpop.f32.mrb[0].mxu0
    %v1224 = vpop.f32.mrb[0].mxu0
    %v1225 = vpop.f32.mrb[0].mxu0
    %1226 = vdwg.mxu0
    %1227 = vadd.xlane.f32.xlu0 %v1214
    %v1228 = vpop.xlane.xlu0 %1227
    %1229 = vadd.xlane.f32.xlu0 %v1217
    %v1230 = vpop.xlane.xlu0 %1229
    %1231 = vadd.xlane.f32.xlu0 %v1222
    %v1232 = vpop.xlane.xlu0 %1231
    %v1233 = vmul.f32 %v1228, 0.03125
    %v1234 = vmul.f32 %v1230, 0.03125
    %v1235 = vmul.f32 %v1232, 0.03125
    %v1236 = vsub.f32 %v1214, %v1233
    %v1237 = vsub.f32 %v1217, %v1234
    %v1238 = vsub.f32 %v1222, %v1235
    %v1239 = vmul.f32 %v1236, %v924
    %v1240 = vmul.f32 %v1237, %v924
    %v1241 = vmul.f32 %v1238, %v924
    %v1242 = vmul.f32 %v1239, %v1239
    %v1243 = vmul.f32 %v1240, %v1240
    %v1244 = vmul.f32 %v1241, %v1241
    %1245 = vadd.xlane.f32.xlu0 %v1242
    %v1246 = vpop.xlane.xlu0 %1245
    %1247 = vadd.xlane.f32.xlu0 %v1243
    %v1248 = vpop.xlane.xlu0 %1247
    %1249 = vadd.xlane.f32.xlu0 %v1244
    %v1250 = vpop.xlane.xlu0 %1249
    %v1251 = vmul.f32 %v1246, 0.03125
    %v1252 = vmul.f32 %v1248, 0.03125
    %v1253 = vmul.f32 %v1250, 0.03125
    %v1254 = vadd.f32 %v1251, 1e-05
    %v1255 = vadd.f32 %v1252, 1e-05
    %v1256 = vadd.f32 %v1253, 1e-05
    %v1257 = vrsqrt.pop %v1254
    %v1258 = vrsqrt.pop %v1255
    %v1259 = vrsqrt.pop %v1256
    %v1260 = vmul.f32 %v1239, %v1257
    %v1261 = vmul.f32 %v1240, %v1258
    %v1262 = vmul.f32 %v1241, %v1259
    %v1263 = vld [vmem:[%s9 + $0x7] sm:$0x1]
    %v1264 = vlaneseq
    %v1265 = vshrl.u32 %v1264, 7
    %v1266 = vsub.s32 0, %v1265
    %v1267 = vrot.slane %v1263, %v1266
    %v1268 = vmul.f32 %v1260, %v1267
    %v1269 = vmul.f32 %v1261, %v1267
    %v1270 = vmul.f32 %v1262, %v1267
    %v1271 = vld [vmem:[%s9 + $0x8] sm:$0x1]
    %v1272 = vlaneseq
    %v1273 = vshrl.u32 %v1272, 7
    %v1274 = vsub.s32 0, %v1273
    %v1275 = vrot.slane %v1271, %v1274
    %v1276 = vadd.f32 %v1268, %v1275
    %v1277 = vadd.f32 %v1269, %v1275
    %v1278 = vadd.f32 %v1270, %v1275
    %v1279 = vmax.f32 %v1276, 0.0
    %v1280 = vmax.f32 %v1277, 0.0
    %v1281 = vmax.f32 %v1278, 0.0
    %v1282 = vpack.c.bf16 %v956, %v955
    %v1283 = vpack.c.bf16 %v1280, %v1279
    %v1284 = vpack.c.bf16 %v1281, %v1281
    %v1286 = vsel %vm678, %v1284, 0
    %1288 = vmatprep.subr.bf16.mxu0 0
    %1289 = vmatpush1.bf16.msra.mxu0 %v1283
    %1290 = vmatprep.subr.bf16.mxu0 0
    %1291 = vmatpush1.bf16.msra.mxu0 %v1286
    %1292 = vmatprep.subr.bf16.mxu0 0
    %1293 = vmatpush1.bf16.msra.mxu0 0
    %1294 = vmatprep.subr.bf16.mxu0 0
    %1295 = vmatpush1.bf16.msra.mxu0 0
    %1296 = vmatprep.subr.bf16.mxu0 0
    %1297 = vmatpush1.bf16.msra.mxu0 0
    %1298 = vmatprep.subr.bf16.mxu0 0
    %1299 = vmatpush1.bf16.msra.mxu0 0
    %1300 = vmatprep.subr.bf16.mxu0 0
    %1301 = vmatpush1.bf16.msra.mxu0 0
    %1302 = vmatprep.subr.bf16.mxu0 0
    %1303 = vmatpush1.bf16.msra.mxu0 0
    %1304 = vmatprep.subr.bf16.mxu0 0
    %1305 = vmatpush1.bf16.msra.mxu0 0
    %1306 = vmatprep.subr.bf16.mxu0 0
    %1307 = vmatpush1.bf16.msra.mxu0 0
    %1308 = vmatprep.subr.bf16.mxu0 0
    %1309 = vmatpush1.bf16.msra.mxu0 0
    %1310 = vmatprep.subr.bf16.mxu0 0
    %1311 = vmatpush1.bf16.msra.mxu0 0
    %1312 = vmatprep.subr.bf16.mxu0 0
    %1313 = vmatpush1.bf16.msra.mxu0 0
    %1314 = vmatprep.subr.bf16.mxu0 0
    %1315 = vmatpush1.bf16.msra.mxu0 0
    %1316 = vmatprep.subr.bf16.mxu0 0
    %1317 = vmatpush1.bf16.msra.mxu0 0
    %1318 = vmatprep.subr.bf16.mxu0 0
    %1319 = vmatpush1.bf16.msra.mxu0 0
    %1320 = vmatprep.mubr.bf16.mxu0 0
    %1321 = vmatmul.mubr.bf16.gmra.mrb[0].mxu0 %v676
    %v1322 = vpop.f32.mrb[0].mxu0
    %v1323 = vadd.f32 0.0, %v1322
    %v1324 = vpop.f32.mrb[0].mxu0
    %v1325 = vpop.f32.mrb[0].mxu0
    %v1326 = vadd.f32 0.0, %v1325
    %v1327 = vpop.f32.mrb[0].mxu0
    %1328 = vdwg.mxu0
    %v1329 = vmul.f32 %v1323, %v728
    %v1330 = vmul.f32 %v1326, %v733
    %v1331 = vpack.c.bf16 %v1330, %v1329
    %s1332 = scalar_lea.vmem [#allocation4], 384
    %v1333 = vld [vmem:[%s1332] sm:$0xf]
    %v1334 = vld [vmem:[%s1332 + $0x4] sm:$0xf]
    %v1335 = vld [vmem:[%s1332 + $0x8] sm:$0xf]
    %v1336 = vld [vmem:[%s1332 + $0xc] sm:$0xf]
    %v1337 = vld [vmem:[%s1332 + $0x10] sm:$0xf]
    %v1338 = vld [vmem:[%s1332 + $0x14] sm:$0xf]
    %v1339 = vld [vmem:[%s1332 + $0x18] sm:$0xf]
    %v1340 = vld [vmem:[%s1332 + $0x1c] sm:$0xf]
    %v1341 = vld [vmem:[%s1332 + $0x20] sm:$0xf]
    %v1342 = vld [vmem:[%s1332 + $0x24] sm:$0xf]
    %v1343 = vld [vmem:[%s1332 + $0x28] sm:$0xf]
    %v1344 = vld [vmem:[%s1332 + $0x2c] sm:$0xf]
    %v1345 = vld [vmem:[%s1332 + $0x30] sm:$0xf]
    %v1346 = vld [vmem:[%s1332 + $0x34] sm:$0xf]
    %v1347 = vld [vmem:[%s1332 + $0x38] sm:$0xf]
    %v1348 = vld [vmem:[%s1332 + $0x3c] sm:$0xf]
    %v1349 = vld [vmem:[%s1332 + $0x40] sm:$0xf]
    %v1350 = vld [vmem:[%s1332 + $0x44] sm:$0xf]
    %v1351 = vld [vmem:[%s1332 + $0x48] sm:$0xf]
    %v1352 = vld [vmem:[%s1332 + $0x4c] sm:$0xf]
    %v1353 = vld [vmem:[%s1332 + $0x50] sm:$0xf]
    %v1354 = vld [vmem:[%s1332 + $0x54] sm:$0xf]
    %v1355 = vld [vmem:[%s1332 + $0x58] sm:$0xf]
    %v1356 = vld [vmem:[%s1332 + $0x5c] sm:$0xf]
    %v1357 = vld [vmem:[%s1332 + $0x60] sm:$0xf]
    %v1358 = vld [vmem:[%s1332 + $0x64] sm:$0xf]
    %v1359 = vld [vmem:[%s1332 + $0x68] sm:$0xf]
    %v1360 = vld [vmem:[%s1332 + $0x6c] sm:$0xf]
    %v1361 = vld [vmem:[%s1332 + $0x70] sm:$0xf]
    %v1362 = vld [vmem:[%s1332 + $0x74] sm:$0xf]
    %v1363 = vld [vmem:[%s1332 + $0x78] sm:$0xf]
    %v1364 = vld [vmem:[%s1332 + $0x7c] sm:$0xf]
    %v1365 = vld [vmem:[%s9 + $0xa] sm:$0x1]
    %v1366 = vlaneseq
    %v1367 = vshrl.u32 %v1366, 7
    %v1368 = vsub.s32 0, %v1367
    %v1369 = vrot.slane %v1365, %v1368
    %v1402 = vunpack.c.l.b16 %v1333
    %v1403 = vunpack.c.l.b16 %v1334
    %v1404 = vunpack.c.l.b16 %v1335
    %v1405 = vunpack.c.l.b16 %v1336
    %v1406 = vunpack.c.l.b16 %v1337
    %v1407 = vunpack.c.l.b16 %v1338
    %v1408 = vunpack.c.l.b16 %v1339
    %v1409 = vunpack.c.l.b16 %v1340
    %v1410 = vunpack.c.l.b16 %v1341
    %v1411 = vunpack.c.l.b16 %v1342
    %v1412 = vunpack.c.l.b16 %v1343
    %v1413 = vunpack.c.l.b16 %v1344
    %v1414 = vunpack.c.l.b16 %v1345
    %v1415 = vunpack.c.l.b16 %v1346
    %v1416 = vunpack.c.l.b16 %v1347
    %v1417 = vunpack.c.l.b16 %v1348
    %v1418 = vunpack.c.l.b16 %v1349
    %v1419 = vunpack.c.l.b16 %v1350
    %v1420 = vunpack.c.l.b16 %v1351
    %v1421 = vunpack.c.l.b16 %v1352
    %v1422 = vunpack.c.l.b16 %v1353
    %v1423 = vunpack.c.l.b16 %v1354
    %v1424 = vunpack.c.l.b16 %v1355
    %v1425 = vunpack.c.l.b16 %v1356
    %v1426 = vunpack.c.l.b16 %v1357
    %v1427 = vunpack.c.l.b16 %v1358
    %v1428 = vunpack.c.l.b16 %v1359
    %v1429 = vunpack.c.l.b16 %v1360
    %v1430 = vunpack.c.l.b16 %v1361
    %v1431 = vunpack.c.l.b16 %v1362
    %v1432 = vunpack.c.l.b16 %v1363
    %v1433 = vunpack.c.l.b16 %v1364
    %v1434 = vpack.c.b16 %v1403, %v1402
    %v1435 = vpack.c.b16 %v1405, %v1404
    %v1436 = vpack.c.b16 %v1407, %v1406
    %v1437 = vpack.c.b16 %v1409, %v1408
    %v1438 = vpack.c.b16 %v1411, %v1410
    %v1439 = vpack.c.b16 %v1413, %v1412
    %v1440 = vpack.c.b16 %v1415, %v1414
    %v1441 = vpack.c.b16 %v1417, %v1416
    %v1442 = vpack.c.b16 %v1419, %v1418
    %v1443 = vpack.c.b16 %v1421, %v1420
    %v1444 = vpack.c.b16 %v1423, %v1422
    %v1445 = vpack.c.b16 %v1425, %v1424
    %v1446 = vpack.c.b16 %v1427, %v1426
    %v1447 = vpack.c.b16 %v1429, %v1428
    %v1448 = vpack.c.b16 %v1431, %v1430
    %v1449 = vpack.c.b16 %v1433, %v1432
    %1466 = vmatprep.subr.bf16.mxu0 0
    %1467 = vmatpush1.bf16.msra.mxu0 %v1434
    %1468 = vmatprep.subr.bf16.mxu0 0
    %1469 = vmatpush1.bf16.msra.mxu0 %v1435
    %1470 = vmatprep.subr.bf16.mxu0 0
    %1471 = vmatpush1.bf16.msra.mxu0 %v1436
    %1472 = vmatprep.subr.bf16.mxu0 0
    %1473 = vmatpush1.bf16.msra.mxu0 %v1437
    %1474 = vmatprep.subr.bf16.mxu0 0
    %1475 = vmatpush1.bf16.msra.mxu0 %v1438
    %1476 = vmatprep.subr.bf16.mxu0 0
    %1477 = vmatpush1.bf16.msra.mxu0 %v1439
    %1478 = vmatprep.subr.bf16.mxu0 0
    %1479 = vmatpush1.bf16.msra.mxu0 %v1440
    %1480 = vmatprep.subr.bf16.mxu0 0
    %1481 = vmatpush1.bf16.msra.mxu0 %v1441
    %1482 = vmatprep.subr.bf16.mxu0 0
    %1483 = vmatpush1.bf16.msra.mxu0 %v1442
    %1484 = vmatprep.subr.bf16.mxu0 0
    %1485 = vmatpush1.bf16.msra.mxu0 %v1443
    %1486 = vmatprep.subr.bf16.mxu0 0
    %1487 = vmatpush1.bf16.msra.mxu0 %v1444
    %1488 = vmatprep.subr.bf16.mxu0 0
    %1489 = vmatpush1.bf16.msra.mxu0 %v1445
    %1490 = vmatprep.subr.bf16.mxu0 0
    %1491 = vmatpush1.bf16.msra.mxu0 %v1446
    %1492 = vmatprep.subr.bf16.mxu0 0
    %1493 = vmatpush1.bf16.msra.mxu0 %v1447
    %1494 = vmatprep.subr.bf16.mxu0 0
    %1495 = vmatpush1.bf16.msra.mxu0 %v1448
    %1496 = vmatprep.subr.bf16.mxu0 0
    %1497 = vmatpush1.bf16.msra.mxu0 %v1449
    %1498 = vmatprep.mubr.bf16.mxu0 %v1282
    %1499 = vmatmul.mubr.bf16.gmra.mrb[0].mxu0 %v1331
    %v1500 = vpop.f32.mrb[0].mxu0
    %v1501 = vadd.f32 %v1369, %v1500
    %v1502 = vpop.f32.mrb[0].mxu0
    %v1503 = vpop.f32.mrb[0].mxu0
    %v1504 = vpop.f32.mrb[0].mxu0
    %1505 = vdwg.mxu0
    %1506 = vadd.xlane.f32.xlu0 %v1501
    %v1507 = vpop.xlane.xlu0 %1506
    %v1508 = vmul.f32 %v1507, 0.03125
    %v1509 = vsub.f32 %v1501, %v1508
    %v1510 = vmul.f32 %v1509, %v924
    %v1511 = vmul.f32 %v1510, %v1510
    %1512 = vadd.xlane.f32.xlu0 %v1511
    %v1513 = vpop.xlane.xlu0 %1512
    %v1514 = vmul.f32 %v1513, 0.03125
    %v1515 = vadd.f32 %v1514, 1e-05
    %v1516 = vrsqrt.pop %v1515
    %v1517 = vmul.f32 %v1510, %v1516
    %v1518 = vld [vmem:[%s9 + $0xb] sm:$0x1]
    %v1519 = vlaneseq
    %v1520 = vshrl.u32 %v1519, 7
    %v1521 = vsub.s32 0, %v1520
    %v1522 = vrot.slane %v1518, %v1521
    %v1523 = vmul.f32 %v1517, %v1522
    %v1524 = vld [vmem:[%s9 + $0xc] sm:$0x1]
    %v1525 = vlaneseq
    %v1526 = vshrl.u32 %v1525, 7
    %v1527 = vsub.s32 0, %v1526
    %v1528 = vrot.slane %v1524, %v1527
    %v1529 = vadd.f32 %v1523, %v1528
    %v1530 = vmax.f32 %v1529, 0.0
    %v1531 = vpack.c.bf16 %v1530, %v1530
    %s1532 = scalar_lea.vmem [#allocation2], 192
    %v1533 = vld [vmem:[%s1532] sm:$0xf]
    %v1534 = vld [vmem:[%s1532 + $0x4] sm:$0xf]
    %v1535 = vld [vmem:[%s1532 + $0x8] sm:$0xf]
    %v1536 = vld [vmem:[%s1532 + $0xc] sm:$0xf]
    %v1537 = vld [vmem:[%s1532 + $0x10] sm:$0xf]
    %v1538 = vld [vmem:[%s1532 + $0x14] sm:$0xf]
    %v1539 = vld [vmem:[%s1532 + $0x18] sm:$0xf]
    %v1540 = vld [vmem:[%s1532 + $0x1c] sm:$0xf]
    %v1541 = vld [vmem:[%s1532 + $0x20] sm:$0xf]
    %v1542 = vld [vmem:[%s1532 + $0x24] sm:$0xf]
    %v1543 = vld [vmem:[%s1532 + $0x28] sm:$0xf]
    %v1544 = vld [vmem:[%s1532 + $0x2c] sm:$0xf]
    %v1545 = vld [vmem:[%s1532 + $0x30] sm:$0xf]
    %v1546 = vld [vmem:[%s1532 + $0x34] sm:$0xf]
    %v1547 = vld [vmem:[%s1532 + $0x38] sm:$0xf]
    %v1548 = vld [vmem:[%s1532 + $0x3c] sm:$0xf]
    %v1549 = vld [vmem:[%s9 + $0xf] sm:$0x1]
    %v1550 = vlaneseq
    %v1551 = vshrl.u32 %v1550, 7
    %v1552 = vsub.s32 0, %v1551
    %v1553 = vrot.slane %v1549, %v1552
    %v1570 = vunpack.c.l.b16 %v1533
    %v1571 = vunpack.c.l.b16 %v1534
    %v1572 = vunpack.c.l.b16 %v1535
    %v1573 = vunpack.c.l.b16 %v1536
    %v1574 = vunpack.c.l.b16 %v1537
    %v1575 = vunpack.c.l.b16 %v1538
    %v1576 = vunpack.c.l.b16 %v1539
    %v1577 = vunpack.c.l.b16 %v1540
    %v1578 = vunpack.c.l.b16 %v1541
    %v1579 = vunpack.c.l.b16 %v1542
    %v1580 = vunpack.c.l.b16 %v1543
    %v1581 = vunpack.c.l.b16 %v1544
    %v1582 = vunpack.c.l.b16 %v1545
    %v1583 = vunpack.c.l.b16 %v1546
    %v1584 = vunpack.c.l.b16 %v1547
    %v1585 = vunpack.c.l.b16 %v1548
    %v1586 = vpack.c.b16 %v1571, %v1570
    %v1587 = vpack.c.b16 %v1573, %v1572
    %v1588 = vpack.c.b16 %v1575, %v1574
    %v1589 = vpack.c.b16 %v1577, %v1576
    %v1590 = vpack.c.b16 %v1579, %v1578
    %v1591 = vpack.c.b16 %v1581, %v1580
    %v1592 = vpack.c.b16 %v1583, %v1582
    %v1593 = vpack.c.b16 %v1585, %v1584
    %1602 = vmatprep.subr.bf16.mxu0 0
    %1603 = vmatpush1.bf16.msra.mxu0 %v1586
    %1604 = vmatprep.subr.bf16.mxu0 0
    %1605 = vmatpush1.bf16.msra.mxu0 %v1587
    %1606 = vmatprep.subr.bf16.mxu0 0
    %1607 = vmatpush1.bf16.msra.mxu0 %v1588
    %1608 = vmatprep.subr.bf16.mxu0 0
    %1609 = vmatpush1.bf16.msra.mxu0 %v1589
    %1610 = vmatprep.subr.bf16.mxu0 0
    %1611 = vmatpush1.bf16.msra.mxu0 %v1590
    %1612 = vmatprep.subr.bf16.mxu0 0
    %1613 = vmatpush1.bf16.msra.mxu0 %v1591
    %1614 = vmatprep.subr.bf16.mxu0 0
    %1615 = vmatpush1.bf16.msra.mxu0 %v1592
    %1616 = vmatprep.subr.bf16.mxu0 0
    %1617 = vmatpush1.bf16.msra.mxu0 %v1593
    %1618 = vmatprep.subr.bf16.mxu0 0
    %1619 = vmatpush1.bf16.msra.mxu0 0
    %1620 = vmatprep.subr.bf16.mxu0 0
    %1621 = vmatpush1.bf16.msra.mxu0 0
    %1622 = vmatprep.subr.bf16.mxu0 0
    %1623 = vmatpush1.bf16.msra.mxu0 0
    %1624 = vmatprep.subr.bf16.mxu0 0
    %1625 = vmatpush1.bf16.msra.mxu0 0
    %1626 = vmatprep.subr.bf16.mxu0 0
    %1627 = vmatpush1.bf16.msra.mxu0 0
    %1628 = vmatprep.subr.bf16.mxu0 0
    %1629 = vmatpush1.bf16.msra.mxu0 0
    %1630 = vmatprep.subr.bf16.mxu0 0
    %1631 = vmatpush1.bf16.msra.mxu0 0
    %1632 = vmatprep.subr.bf16.mxu0 0
    %1633 = vmatpush1.bf16.msra.mxu0 0
    %1634 = vmatprep.mubr.bf16.mxu0 0
    %1635 = vmatmul.mubr.bf16.gmra.mrb[0].mxu0 %v1531
    %v1636 = vpop.f32.mrb[0].mxu0
    %v1637 = vadd.f32 %v1553, %v1636
    %v1638 = vpop.f32.mrb[0].mxu0
    %v1639 = vpop.f32.mrb[0].mxu0
    %v1640 = vpop.f32.mrb[0].mxu0
    %1641 = vdwg.mxu0
    %1642 = vst [vmem:[%s10] sm:$0xff] %v1637
    // Predicated region
    $region50: #{forward.1} parent=1 // pred_check
      _
    $region51: #{forward.1} parent=1 // pred_check_branch
      %1644 = sbr.rel (0) target = $region53
    $region52: #{forward.1} parent=1 // pred_region
      _
    $region53: #{forward.1} parent=1 // pred_fallthru
      _
    // Predicated region
    $region54: #{forward.1} parent=1 // pred_check
      _
    $region55: #{forward.1} parent=1 // pred_check_branch
      %1646 = sbr.rel (0) target = $region57
    $region56: #{forward.1} parent=1 // pred_region
      _
    $region57: #{forward.1} parent=1 // pred_fallthru
      _
    %1647 = vsyncpa [#allocation3], 1
    %1648 = vsyncpa [#allocation5], 1

</llo_original>
